<compile_context>
chip_gen: v7x
topology: tpu7x:2x2x1
jax: 0.10.0
libtpu: 0.0.40
codegen_flags: <defaults>
</compile_context>

<pallas_src>
import functools

import jax
import jax.numpy as jnp
from jax import lax
from jax.experimental import pallas as pl
from jax.experimental.pallas import tpu as pltpu

LN_EPS = 1e-5


def _attention_kernel(x_ref, gamma_ref, beta_ref, wqkv_ref, wo_ref, bo_ref,
                      o_ref, *, heads, dim_head, use_bf16_matmul):
    N = x_ref.shape[1]
    dim = x_ref.shape[2]
    inner = heads * dim_head
    scale = dim_head ** (-0.5)
    mm_dtype = jnp.bfloat16 if use_bf16_matmul else jnp.float32

    # --- Hoist small parameter reads (single read each; no re-broadcasts). ---
    gamma = gamma_ref[...].astype(jnp.float32)   # (1, dim)
    beta = beta_ref[...].astype(jnp.float32)     # (1, dim)
    wqkv = wqkv_ref[...]                         # (dim, 3*inner)
    wo = wo_ref[...]                             # (inner, dim)
    bo = bo_ref[...].astype(jnp.float32)         # (1, dim)

    x = x_ref[...][0].astype(jnp.float32)        # (N, dim)

    # --- LayerNorm (f32, biased variance, eps=1e-5: matches nn.LayerNorm). ---
    mean = jnp.mean(x, axis=-1, keepdims=True)
    xc = x - mean
    var = jnp.mean(xc * xc, axis=-1, keepdims=True)
    xn = xc * lax.rsqrt(var + LN_EPS)
    xn = xn * gamma + beta

    # --- qkv projection (no bias), f32 accumulation on the MXU. ---
    qkv = jnp.dot(xn.astype(mm_dtype), wqkv.astype(mm_dtype),
                  preferred_element_type=jnp.float32)      # (N, 3*inner)

    # --- Per-head attention.  `heads` is small & static -> unrolled loop with
    #     static last-dim slices; q@k^T done via dot_general (no transpose).
    #     The output projection is accumulated per head:
    #         concat_h(out_h) @ Wo == sum_h out_h @ Wo[h*dh:(h+1)*dh, :]
    #     which avoids an in-kernel concatenate entirely. ---
    y = jnp.zeros((N, dim), jnp.float32)
    for h in range(heads):
        lo = h * dim_head
        hi = (h + 1) * dim_head
        q = qkv[:, lo:hi]
        k = qkv[:, inner + lo: inner + hi]
        v = qkv[:, 2 * inner + lo: 2 * inner + hi]

        dots = lax.dot_general(
            q.astype(mm_dtype), k.astype(mm_dtype),
            (((1,), (1,)), ((), ())),                       # q @ k^T
            preferred_element_type=jnp.float32) * scale     # (N, N)

        # Softmax over keys (stable form; f32 VPU/EUP math).
        dots = dots - jnp.max(dots, axis=-1, keepdims=True)
        e = jnp.exp(dots)
        attn = e / jnp.sum(e, axis=-1, keepdims=True)
        # Dropout(p=0.0) on attn is identity in eval; nothing to do.

        out_h = jnp.dot(attn.astype(mm_dtype), v.astype(mm_dtype),
                        preferred_element_type=jnp.float32)  # (N, dim_head)
        y = y + jnp.dot(out_h.astype(mm_dtype),
                        wo[lo:hi, :].astype(mm_dtype),
                        preferred_element_type=jnp.float32)  # (N, dim)

    y = y + bo

    # TODO(synk): when dim < 128 and (N*dim) % 128 == 0, present a lane-dense
    # (N*dim//128, 128) output slab instead so stores are full-width vst rather
    # than masked vst.msk (biggest mem-bound lever per the perf review).
    o_ref[...] = y[None].astype(o_ref.dtype)


def attention(x, gamma, beta, w_qkv, w_out, b_out, *, heads, dim_head,
              use_bf16_matmul=False):
    """x: (B, N, dim).  w_qkv: (dim, 3*heads*dim_head) (no bias).
    w_out: (heads*dim_head, dim), b_out: (dim,).  Returns (B, N, dim)."""
    B, N, dim = x.shape
    inner = heads * dim_head
    assert w_qkv.shape == (dim, 3 * inner)
    assert w_out.shape == (inner, dim)

    gamma2 = gamma.reshape(1, dim)
    beta2 = beta.reshape(1, dim)
    bo2 = b_out.reshape(1, dim)

    # Advisory cost estimate for XLA's scheduler.
    flops = (2 * B * N * dim * 3 * inner           # qkv projection
             + 2 * B * heads * N * N * dim_head    # q @ k^T
             + 2 * B * heads * N * N * dim_head    # attn @ v
             + 2 * B * N * inner * dim)            # output projection
    transcendentals = B * heads * N * N            # softmax exp
    bytes_accessed = (2 * B * N * dim * 4
                      + (dim * 3 * inner + inner * dim + 3 * dim) * 4)

    kernel = functools.partial(_attention_kernel, heads=heads,
                               dim_head=dim_head,
                               use_bf16_matmul=use_bf16_matmul)

    out = pl.pallas_call(
        kernel,
        out_shape=jax.ShapeDtypeStruct((B, N, dim), x.dtype),
        grid_spec=pltpu.PrefetchScalarGridSpec(
            num_scalar_prefetch=0,
            grid=(B,),
            in_specs=[
                # One full batch element (N, dim) per grid step; last two block
                # dims equal the full array dims, so arbitrary N is legal.
                pl.BlockSpec((1, N, dim), lambda b: (b, 0, 0)),     # x
                pl.BlockSpec((1, dim), lambda b: (0, 0)),           # gamma
                pl.BlockSpec((1, dim), lambda b: (0, 0)),           # beta
                pl.BlockSpec((dim, 3 * inner), lambda b: (0, 0)),   # W_qkv
                pl.BlockSpec((inner, dim), lambda b: (0, 0)),       # W_out
                pl.BlockSpec((1, dim), lambda b: (0, 0)),           # b_out
            ],
            out_specs=pl.BlockSpec((1, N, dim), lambda b: (b, 0, 0)),
        ),
        compiler_params=pltpu.CompilerParams(
            dimension_semantics=("parallel",)),   # shard batch over TCs (v7x)
        cost_estimate=pl.CostEstimate(flops=flops,
                                      transcendentals=transcendentals,
                                      bytes_accessed=bytes_accessed),
    )(x, gamma2, beta2, w_qkv, w_out, bo2)
    return out


def _reference(x, gamma, beta, w_qkv, w_out, b_out, *, heads, dim_head):
    B, N, dim = x.shape
    inner = heads * dim_head
    xf = x.astype(jnp.float32)
    mean = jnp.mean(xf, axis=-1, keepdims=True)
    var = jnp.mean((xf - mean) ** 2, axis=-1, keepdims=True)
    xn = (xf - mean) * lax.rsqrt(var + LN_EPS) * gamma + beta
    qkv = xn @ w_qkv
    q, k, v = jnp.split(qkv, 3, axis=-1)
    sh = lambda t: t.reshape(B, N, heads, dim_head).transpose(0, 2, 1, 3)
    q, k, v = sh(q), sh(k), sh(v)
    dots = jnp.einsum('bhnd,bhmd->bhnm', q, k) * (dim_head ** -0.5)
    attn = jax.nn.softmax(dots, axis=-1)
    out = jnp.einsum('bhnm,bhmd->bhnd', attn, v)
    out = out.transpose(0, 2, 1, 3).reshape(B, N, inner)
    return out @ w_out + b_out


if __name__ == "__main__":
    key = jax.random.PRNGKey(0)
    B, N, dim = 2, 8, 32
    heads, dim_head = 4, 16          # inner_dim = 64, project_out = True
    inner = heads * dim_head

    k_x, k_g, k_b, k_wq, k_wo, k_bo = jax.random.split(key, 6)
    x = jax.random.normal(k_x, (B, N, dim), dtype=jnp.float32)

    # Deterministic synthetic parameters (PyTorch-like shapes, JAX (in,out) layout).
    gamma = jnp.ones((dim,), jnp.float32) + 0.01 * jax.random.normal(k_g, (dim,))
    beta = 0.01 * jax.random.normal(k_b, (dim,), dtype=jnp.float32)
    w_qkv = jax.random.normal(k_wq, (dim, 3 * inner), dtype=jnp.float32) / jnp.sqrt(dim)
    w_out = jax.random.normal(k_wo, (inner, dim), dtype=jnp.float32) / jnp.sqrt(inner)
    b_out = 0.01 * jax.random.normal(k_bo, (dim,), dtype=jnp.float32)

    y_ref = _reference(x, gamma, beta, w_qkv, w_out, b_out,
                       heads=heads, dim_head=dim_head)

    # f32 MXU path: must match the f32 (PyTorch-semantics) reference tightly.
    y = attention(x, gamma, beta, w_qkv, w_out, b_out,
                  heads=heads, dim_head=dim_head, use_bf16_matmul=False)
    y = jax.block_until_ready(y)
    assert y.shape == (B, N, dim)
    assert jnp.allclose(y, y_ref, atol=1e-4, rtol=1e-4), (
        float(jnp.max(jnp.abs(y - y_ref))))

    # bf16 MXU-operand path (perf-review item for v6e/v7x): looser tolerance.
    y_bf16 = attention(x, gamma, beta, w_qkv, w_out, b_out,
                       heads=heads, dim_head=dim_head, use_bf16_matmul=True)
    y_bf16 = jax.block_until_ready(y_bf16)
    assert jnp.allclose(y_bf16, y_ref, atol=1e-1, rtol=5e-2), (
        float(jnp.max(jnp.abs(y_bf16 - y_ref))))

    print("KERNEL_OK")
</pallas_src>

<mosaic_0001>
module attributes {stable_mosaic.version = 11 : i64} {
  func.func @_attention_kernel(%arg0: i32, %arg1: memref<1x8x32xf32, #tpu.memory_space<vmem>>, %arg2: memref<1x32xf32, #tpu.memory_space<vmem>>, %arg3: memref<1x32xf32, #tpu.memory_space<vmem>>, %arg4: memref<32x192xf32, #tpu.memory_space<vmem>>, %arg5: memref<64x32xf32, #tpu.memory_space<vmem>>, %arg6: memref<1x32xf32, #tpu.memory_space<vmem>>, %arg7: memref<1x8x32xf32, #tpu.memory_space<vmem>>) attributes {dimension_semantics = [#tpu.dimension_semantics<parallel>], iteration_bounds = array<i64: 2>, scalar_prefetch = 0 : i64, scratch_operands = 0 : i64, tpu.core_type = #tpu.core_type<tc>, window_params = [{transform_indices = @transform_0, window_bounds = array<i64: 1, 8, 32>}, {pipeline_mode = #tpu.pipeline_mode<synchronous>, transform_indices = @transform_1, window_bounds = array<i64: 1, 32>}, {pipeline_mode = #tpu.pipeline_mode<synchronous>, transform_indices = @transform_2, window_bounds = array<i64: 1, 32>}, {pipeline_mode = #tpu.pipeline_mode<synchronous>, transform_indices = @transform_3, window_bounds = array<i64: 32, 192>}, {pipeline_mode = #tpu.pipeline_mode<synchronous>, transform_indices = @transform_4, window_bounds = array<i64: 64, 32>}, {pipeline_mode = #tpu.pipeline_mode<synchronous>, transform_indices = @transform_5, window_bounds = array<i64: 1, 32>}, {transform_indices = @transform_6, window_bounds = array<i64: 1, 8, 32>}]} {
    %c0 = arith.constant 0 : index
    %c0_0 = arith.constant 0 : index
    %0 = vector.load %arg2[%c0, %c0_0] : memref<1x32xf32, #tpu.memory_space<vmem>>, vector<1x32xf32>
    %c0_1 = arith.constant 0 : index
    %c0_2 = arith.constant 0 : index
    %1 = vector.load %arg3[%c0_1, %c0_2] : memref<1x32xf32, #tpu.memory_space<vmem>>, vector<1x32xf32>
    %c0_3 = arith.constant 0 : index
    %c0_4 = arith.constant 0 : index
    %2 = vector.load %arg4[%c0_3, %c0_4] : memref<32x192xf32, #tpu.memory_space<vmem>>, vector<32x192xf32>
    %c0_5 = arith.constant 0 : index
    %c0_6 = arith.constant 0 : index
    %3 = vector.load %arg5[%c0_5, %c0_6] : memref<64x32xf32, #tpu.memory_space<vmem>>, vector<64x32xf32>
    %c0_7 = arith.constant 0 : index
    %c0_8 = arith.constant 0 : index
    %4 = vector.load %arg6[%c0_7, %c0_8] : memref<1x32xf32, #tpu.memory_space<vmem>>, vector<1x32xf32>
    %c0_9 = arith.constant 0 : index
    %c0_10 = arith.constant 0 : index
    %c0_11 = arith.constant 0 : index
    %5 = vector.load %arg1[%c0_9, %c0_10, %c0_11] : memref<1x8x32xf32, #tpu.memory_space<vmem>>, vector<1x8x32xf32>
    %6 = vector.shape_cast %5 : vector<1x8x32xf32> to vector<8x32xf32>
    %cst = arith.constant dense<0.000000e+00> : vector<8xf32>
    %7 = vector.multi_reduction <add>, %6, %cst [1] : vector<8x32xf32> to vector<8xf32>
    %8 = vector.shape_cast %7 : vector<8xf32> to vector<8x1xf32>
    %cst_12 = arith.constant 3.200000e+01 : f32
    %9 = vector.broadcast %cst_12 : f32 to vector<8x1xf32>
    %10 = arith.divf %8, %9 : vector<8x1xf32>
    %11 = vector.broadcast %10 : vector<8x1xf32> to vector<8x32xf32>
    %12 = arith.subf %6, %11 : vector<8x32xf32>
    %13 = arith.mulf %12, %12 : vector<8x32xf32>
    %cst_13 = arith.constant dense<0.000000e+00> : vector<8xf32>
    %14 = vector.multi_reduction <add>, %13, %cst_13 [1] : vector<8x32xf32> to vector<8xf32>
    %15 = vector.shape_cast %14 : vector<8xf32> to vector<8x1xf32>
    %cst_14 = arith.constant 3.200000e+01 : f32
    %16 = vector.broadcast %cst_14 : f32 to vector<8x1xf32>
    %17 = arith.divf %15, %16 : vector<8x1xf32>
    %cst_15 = arith.constant 9.99999974E-6 : f32
    %18 = vector.broadcast %cst_15 : f32 to vector<8x1xf32>
    %19 = arith.addf %17, %18 : vector<8x1xf32>
    %20 = math.rsqrt %19 : vector<8x1xf32>
    %21 = vector.broadcast %20 : vector<8x1xf32> to vector<8x32xf32>
    %22 = arith.mulf %12, %21 : vector<8x32xf32>
    %23 = vector.broadcast %0 : vector<1x32xf32> to vector<8x32xf32>
    %24 = arith.mulf %22, %23 : vector<8x32xf32>
    %25 = vector.broadcast %1 : vector<1x32xf32> to vector<8x32xf32>
    %26 = arith.addf %24, %25 : vector<8x32xf32>
    %cst_16 = arith.constant dense<0.000000e+00> : vector<8x192xf32>
    %27 = tpu.matmul %26, %2, %cst_16 {dimension_numbers = #tpu.dot_dimension_numbers<[1], [0], [0], [1], [0, 0, 1, 1], [], []>} : vector<8x32xf32>, vector<32x192xf32>, vector<8x192xf32> -> vector<8x192xf32>
    %cst_17 = arith.constant 0.000000e+00 : f32
    %28 = vector.broadcast %cst_17 : f32 to vector<8x32xf32>
    %29 = vector.extract_strided_slice %27 {offsets = [0, 0], sizes = [8, 16], strides = [1, 1]} : vector<8x192xf32> to vector<8x16xf32>
    %30 = vector.extract_strided_slice %27 {offsets = [0, 64], sizes = [8, 16], strides = [1, 1]} : vector<8x192xf32> to vector<8x16xf32>
    %31 = vector.extract_strided_slice %27 {offsets = [0, 128], sizes = [8, 16], strides = [1, 1]} : vector<8x192xf32> to vector<8x16xf32>
    %cst_18 = arith.constant dense<0.000000e+00> : vector<8x8xf32>
    %32 = tpu.matmul %29, %30, %cst_18 {dimension_numbers = #tpu.dot_dimension_numbers<[1], [1], [0], [0], [0, 0, 1, 0], [], []>} : vector<8x16xf32>, vector<8x16xf32>, vector<8x8xf32> -> vector<8x8xf32>
    %cst_19 = arith.constant 2.500000e-01 : f32
    %33 = vector.broadcast %cst_19 : f32 to vector<8x8xf32>
    %34 = arith.mulf %32, %33 : vector<8x8xf32>
    %cst_20 = arith.constant dense<0xFF800000> : vector<8xf32>
    %35 = vector.multi_reduction <maximumf>, %34, %cst_20 [1] : vector<8x8xf32> to vector<8xf32>
    %36 = vector.shape_cast %35 : vector<8xf32> to vector<8x1xf32>
    %37 = vector.broadcast %36 : vector<8x1xf32> to vector<8x8xf32>
    %38 = arith.subf %34, %37 : vector<8x8xf32>
    %39 = math.exp %38 : vector<8x8xf32>
    %cst_21 = arith.constant dense<0.000000e+00> : vector<8xf32>
    %40 = vector.multi_reduction <add>, %39, %cst_21 [1] : vector<8x8xf32> to vector<8xf32>
    %41 = vector.shape_cast %40 : vector<8xf32> to vector<8x1xf32>
    %42 = vector.broadcast %41 : vector<8x1xf32> to vector<8x8xf32>
    %43 = arith.divf %39, %42 : vector<8x8xf32>
    %cst_22 = arith.constant dense<0.000000e+00> : vector<8x16xf32>
    %44 = tpu.matmul %43, %31, %cst_22 {dimension_numbers = #tpu.dot_dimension_numbers<[1], [0], [0], [1], [0, 0, 1, 1], [], []>} : vector<8x8xf32>, vector<8x16xf32>, vector<8x16xf32> -> vector<8x16xf32>
    %45 = vector.extract_strided_slice %3 {offsets = [0, 0], sizes = [16, 32], strides = [1, 1]} : vector<64x32xf32> to vector<16x32xf32>
    %cst_23 = arith.constant dense<0.000000e+00> : vector<8x32xf32>
    %46 = tpu.matmul %44, %45, %cst_23 {dimension_numbers = #tpu.dot_dimension_numbers<[1], [0], [0], [1], [0, 0, 1, 1], [], []>} : vector<8x16xf32>, vector<16x32xf32>, vector<8x32xf32> -> vector<8x32xf32>
    %47 = arith.addf %28, %46 : vector<8x32xf32>
    %48 = vector.extract_strided_slice %27 {offsets = [0, 16], sizes = [8, 16], strides = [1, 1]} : vector<8x192xf32> to vector<8x16xf32>
    %49 = vector.extract_strided_slice %27 {offsets = [0, 80], sizes = [8, 16], strides = [1, 1]} : vector<8x192xf32> to vector<8x16xf32>
    %50 = vector.extract_strided_slice %27 {offsets = [0, 144], sizes = [8, 16], strides = [1, 1]} : vector<8x192xf32> to vector<8x16xf32>
    %cst_24 = arith.constant dense<0.000000e+00> : vector<8x8xf32>
    %51 = tpu.matmul %48, %49, %cst_24 {dimension_numbers = #tpu.dot_dimension_numbers<[1], [1], [0], [0], [0, 0, 1, 0], [], []>} : vector<8x16xf32>, vector<8x16xf32>, vector<8x8xf32> -> vector<8x8xf32>
    %cst_25 = arith.constant 2.500000e-01 : f32
    %52 = vector.broadcast %cst_25 : f32 to vector<8x8xf32>
    %53 = arith.mulf %51, %52 : vector<8x8xf32>
    %cst_26 = arith.constant dense<0xFF800000> : vector<8xf32>
    %54 = vector.multi_reduction <maximumf>, %53, %cst_26 [1] : vector<8x8xf32> to vector<8xf32>
    %55 = vector.shape_cast %54 : vector<8xf32> to vector<8x1xf32>
    %56 = vector.broadcast %55 : vector<8x1xf32> to vector<8x8xf32>
    %57 = arith.subf %53, %56 : vector<8x8xf32>
    %58 = math.exp %57 : vector<8x8xf32>
    %cst_27 = arith.constant dense<0.000000e+00> : vector<8xf32>
    %59 = vector.multi_reduction <add>, %58, %cst_27 [1] : vector<8x8xf32> to vector<8xf32>
    %60 = vector.shape_cast %59 : vector<8xf32> to vector<8x1xf32>
    %61 = vector.broadcast %60 : vector<8x1xf32> to vector<8x8xf32>
    %62 = arith.divf %58, %61 : vector<8x8xf32>
    %cst_28 = arith.constant dense<0.000000e+00> : vector<8x16xf32>
    %63 = tpu.matmul %62, %50, %cst_28 {dimension_numbers = #tpu.dot_dimension_numbers<[1], [0], [0], [1], [0, 0, 1, 1], [], []>} : vector<8x8xf32>, vector<8x16xf32>, vector<8x16xf32> -> vector<8x16xf32>
    %64 = vector.extract_strided_slice %3 {offsets = [16, 0], sizes = [16, 32], strides = [1, 1]} : vector<64x32xf32> to vector<16x32xf32>
    %cst_29 = arith.constant dense<0.000000e+00> : vector<8x32xf32>
    %65 = tpu.matmul %63, %64, %cst_29 {dimension_numbers = #tpu.dot_dimension_numbers<[1], [0], [0], [1], [0, 0, 1, 1], [], []>} : vector<8x16xf32>, vector<16x32xf32>, vector<8x32xf32> -> vector<8x32xf32>
    %66 = arith.addf %47, %65 : vector<8x32xf32>
    %67 = vector.extract_strided_slice %27 {offsets = [0, 32], sizes = [8, 16], strides = [1, 1]} : vector<8x192xf32> to vector<8x16xf32>
    %68 = vector.extract_strided_slice %27 {offsets = [0, 96], sizes = [8, 16], strides = [1, 1]} : vector<8x192xf32> to vector<8x16xf32>
    %69 = vector.extract_strided_slice %27 {offsets = [0, 160], sizes = [8, 16], strides = [1, 1]} : vector<8x192xf32> to vector<8x16xf32>
    %cst_30 = arith.constant dense<0.000000e+00> : vector<8x8xf32>
    %70 = tpu.matmul %67, %68, %cst_30 {dimension_numbers = #tpu.dot_dimension_numbers<[1], [1], [0], [0], [0, 0, 1, 0], [], []>} : vector<8x16xf32>, vector<8x16xf32>, vector<8x8xf32> -> vector<8x8xf32>
    %cst_31 = arith.constant 2.500000e-01 : f32
    %71 = vector.broadcast %cst_31 : f32 to vector<8x8xf32>
    %72 = arith.mulf %70, %71 : vector<8x8xf32>
    %cst_32 = arith.constant dense<0xFF800000> : vector<8xf32>
    %73 = vector.multi_reduction <maximumf>, %72, %cst_32 [1] : vector<8x8xf32> to vector<8xf32>
    %74 = vector.shape_cast %73 : vector<8xf32> to vector<8x1xf32>
    %75 = vector.broadcast %74 : vector<8x1xf32> to vector<8x8xf32>
    %76 = arith.subf %72, %75 : vector<8x8xf32>
    %77 = math.exp %76 : vector<8x8xf32>
    %cst_33 = arith.constant dense<0.000000e+00> : vector<8xf32>
    %78 = vector.multi_reduction <add>, %77, %cst_33 [1] : vector<8x8xf32> to vector<8xf32>
    %79 = vector.shape_cast %78 : vector<8xf32> to vector<8x1xf32>
    %80 = vector.broadcast %79 : vector<8x1xf32> to vector<8x8xf32>
    %81 = arith.divf %77, %80 : vector<8x8xf32>
    %cst_34 = arith.constant dense<0.000000e+00> : vector<8x16xf32>
    %82 = tpu.matmul %81, %69, %cst_34 {dimension_numbers = #tpu.dot_dimension_numbers<[1], [0], [0], [1], [0, 0, 1, 1], [], []>} : vector<8x8xf32>, vector<8x16xf32>, vector<8x16xf32> -> vector<8x16xf32>
    %83 = vector.extract_strided_slice %3 {offsets = [32, 0], sizes = [16, 32], strides = [1, 1]} : vector<64x32xf32> to vector<16x32xf32>
    %cst_35 = arith.constant dense<0.000000e+00> : vector<8x32xf32>
    %84 = tpu.matmul %82, %83, %cst_35 {dimension_numbers = #tpu.dot_dimension_numbers<[1], [0], [0], [1], [0, 0, 1, 1], [], []>} : vector<8x16xf32>, vector<16x32xf32>, vector<8x32xf32> -> vector<8x32xf32>
    %85 = arith.addf %66, %84 : vector<8x32xf32>
    %86 = vector.extract_strided_slice %27 {offsets = [0, 48], sizes = [8, 16], strides = [1, 1]} : vector<8x192xf32> to vector<8x16xf32>
    %87 = vector.extract_strided_slice %27 {offsets = [0, 112], sizes = [8, 16], strides = [1, 1]} : vector<8x192xf32> to vector<8x16xf32>
    %88 = vector.extract_strided_slice %27 {offsets = [0, 176], sizes = [8, 16], strides = [1, 1]} : vector<8x192xf32> to vector<8x16xf32>
    %cst_36 = arith.constant dense<0.000000e+00> : vector<8x8xf32>
    %89 = tpu.matmul %86, %87, %cst_36 {dimension_numbers = #tpu.dot_dimension_numbers<[1], [1], [0], [0], [0, 0, 1, 0], [], []>} : vector<8x16xf32>, vector<8x16xf32>, vector<8x8xf32> -> vector<8x8xf32>
    %cst_37 = arith.constant 2.500000e-01 : f32
    %90 = vector.broadcast %cst_37 : f32 to vector<8x8xf32>
    %91 = arith.mulf %89, %90 : vector<8x8xf32>
    %cst_38 = arith.constant dense<0xFF800000> : vector<8xf32>
    %92 = vector.multi_reduction <maximumf>, %91, %cst_38 [1] : vector<8x8xf32> to vector<8xf32>
    %93 = vector.shape_cast %92 : vector<8xf32> to vector<8x1xf32>
    %94 = vector.broadcast %93 : vector<8x1xf32> to vector<8x8xf32>
    %95 = arith.subf %91, %94 : vector<8x8xf32>
    %96 = math.exp %95 : vector<8x8xf32>
    %cst_39 = arith.constant dense<0.000000e+00> : vector<8xf32>
    %97 = vector.multi_reduction <add>, %96, %cst_39 [1] : vector<8x8xf32> to vector<8xf32>
    %98 = vector.shape_cast %97 : vector<8xf32> to vector<8x1xf32>
    %99 = vector.broadcast %98 : vector<8x1xf32> to vector<8x8xf32>
    %100 = arith.divf %96, %99 : vector<8x8xf32>
    %cst_40 = arith.constant dense<0.000000e+00> : vector<8x16xf32>
    %101 = tpu.matmul %100, %88, %cst_40 {dimension_numbers = #tpu.dot_dimension_numbers<[1], [0], [0], [1], [0, 0, 1, 1], [], []>} : vector<8x8xf32>, vector<8x16xf32>, vector<8x16xf32> -> vector<8x16xf32>
    %102 = vector.extract_strided_slice %3 {offsets = [48, 0], sizes = [16, 32], strides = [1, 1]} : vector<64x32xf32> to vector<16x32xf32>
    %cst_41 = arith.constant dense<0.000000e+00> : vector<8x32xf32>
    %103 = tpu.matmul %101, %102, %cst_41 {dimension_numbers = #tpu.dot_dimension_numbers<[1], [0], [0], [1], [0, 0, 1, 1], [], []>} : vector<8x16xf32>, vector<16x32xf32>, vector<8x32xf32> -> vector<8x32xf32>
    %104 = arith.addf %85, %103 : vector<8x32xf32>
    %105 = vector.broadcast %4 : vector<1x32xf32> to vector<8x32xf32>
    %106 = arith.addf %104, %105 : vector<8x32xf32>
    %107 = vector.shape_cast %106 : vector<8x32xf32> to vector<1x8x32xf32>
    %c0_42 = arith.constant 0 : index
    %c0_43 = arith.constant 0 : index
    %c0_44 = arith.constant 0 : index
    %108 = vector.load %arg7[%c0_42, %c0_43, %c0_44] : memref<1x8x32xf32, #tpu.memory_space<vmem>>, vector<1x8x32xf32>
    tpu.vector_store %arg7[%c0_42, %c0_43, %c0_44], %107 {strides = array<i32>} : memref<1x8x32xf32, #tpu.memory_space<vmem>>, vector<1x8x32xf32>,
    return
  }
  func.func @transform_0(%arg0: i32) -> (i32, i32, i32) {
    %c0_i32 = arith.constant 0 : i32
    %c0_i32_0 = arith.constant 0 : i32
    %c0_i32_1 = arith.constant 0 : i32
    return %arg0, %c0_i32, %c0_i32_0 : i32, i32, i32
  }
  func.func @transform_1(%arg0: i32) -> (i32, i32) {
    %c0_i32 = arith.constant 0 : i32
    %c0_i32_0 = arith.constant 0 : i32
    %c0_i32_1 = arith.constant 0 : i32
    return %c0_i32, %c0_i32_0 : i32, i32
  }
  func.func @transform_2(%arg0: i32) -> (i32, i32) {
    %c0_i32 = arith.constant 0 : i32
    %c0_i32_0 = arith.constant 0 : i32
    %c0_i32_1 = arith.constant 0 : i32
    return %c0_i32, %c0_i32_0 : i32, i32
  }
  func.func @transform_3(%arg0: i32) -> (i32, i32) {
    %c0_i32 = arith.constant 0 : i32
    %c0_i32_0 = arith.constant 0 : i32
    %c0_i32_1 = arith.constant 0 : i32
    return %c0_i32, %c0_i32_0 : i32, i32
  }
  func.func @transform_4(%arg0: i32) -> (i32, i32) {
    %c0_i32 = arith.constant 0 : i32
    %c0_i32_0 = arith.constant 0 : i32
    %c0_i32_1 = arith.constant 0 : i32
    return %c0_i32, %c0_i32_0 : i32, i32
  }
  func.func @transform_5(%arg0: i32) -> (i32, i32) {
    %c0_i32 = arith.constant 0 : i32
    %c0_i32_0 = arith.constant 0 : i32
    %c0_i32_1 = arith.constant 0 : i32
    return %c0_i32, %c0_i32_0 : i32, i32
  }
  func.func @transform_6(%arg0: i32) -> (i32, i32, i32) {
    %c0_i32 = arith.constant 0 : i32
    %c0_i32_0 = arith.constant 0 : i32
    %c0_i32_1 = arith.constant 0 : i32
    return %arg0, %c0_i32, %c0_i32_0 : i32, i32, i32
  }
}

</mosaic_0001>

<llo_original>
// kernel: tpu_custom_call.1
$region0: #{tpu_custom_call.1}
  #allocation0 [shape = 'u32[]', space=smem, size = 0x4, offset = 0x4, fixed_abs, tag = 'smem constant byte address 0x4 - core index']
  #allocation1 [shape = 'u32[144,128]{1,0:T(1,128)}', space=vmem, size = 0x12000, scoped, tag = 'internal scratch']
  %s0 = inlined_call_operand.vmem [shape: f32[2,8,32], index: 0, kind: input, shape index: {}]
  %s1 = inlined_call_operand.vmem [shape: f32[1,32], index: 1, kind: input, shape index: {}]
  %s2 = inlined_call_operand.vmem [shape: f32[1,32], index: 2, kind: input, shape index: {}]
  %s3 = inlined_call_operand.vmem [shape: f32[32,192], index: 3, kind: input, shape index: {}]
  %s4 = inlined_call_operand.vmem [shape: f32[64,32], index: 4, kind: input, shape index: {}]
  %s5 = inlined_call_operand.vmem [shape: f32[1,32], index: 5, kind: input, shape index: {}]
  %s6 = inlined_call_operand.hbm [shape: f32[2,8,32], index: 6, kind: output, shape index: {}]
  %s7 = sld [smem:[#allocation0]]
  $region57: #{tpu_custom_call.1} parent=0
    _
  %s9 = ssub.s32 1, %s7
  %s10 = scalar_select 0, %s9, %s7
  $region1: #{tpu_custom_call.1} parent=0
    #allocation2 [shape = 'u8[8192]{0}', space=vmem, size = 0x2000, scoped, tag = 'output window, operand 0']
    #allocation3 [shape = 's32[2]{0}', space=sflag, size = 0x8, scoped, tag = 'scoped memory for tpu_custom_call.1']
    %11 = vsyncpa [#allocation3], 0
    %s12 = scalar_lea.sflag [#allocation3], 1
    %13 = vsyncpa %s12, 0
    loop: start=0, step=1, limit=4
    $region2: #{tpu_custom_call.1} parent=1 // loop_pre_header
      _
    $region3: #{tpu_custom_call.1} parent=1 // loop_header
      %s15 = sphi 0, %s19
      %p16 = scmp.ge.s32.totalorder %s15, 4
      %s25 = sphi 0, %s27
      %s28 = sphi 0, %s25
      %s29 = sphi 0, %s28
      %s45 = sphi 0, %s29
      %s49 = sphi 0, %s49
      %s51 = sphi 0, %s49
      %s52 = sphi 0, %s51
      %s66 = sphi 0, %s52
      %s70 = sphi 0, %s70
      %s72 = sphi 0, %s70
      %s73 = sphi 0, %s72
      %s87 = sphi 0, %s73
      %s91 = sphi 0, %s91
      %s93 = sphi 0, %s91
      %s94 = sphi 0, %s93
      %s108 = sphi 0, %s94
      %s112 = sphi 0, %s112
      %s114 = sphi 0, %s112
      %s115 = sphi 0, %s114
      %s129 = sphi 0, %s115
      %s133 = sphi 0, %s133
      %s135 = sphi 0, %s133
      %s136 = sphi 0, %s135
      %s150 = sphi 0, %s136
      %s156 = sphi 0, %s158
      %s159 = sphi 0, %s156
      %s160 = sphi 0, %s159
      %s176 = sphi 0, %s160
    $region4: #{tpu_custom_call.1} parent=1 // loop_header_branch
      %18 = sbr.rel (%p16) target = $region8
    $region5: #{tpu_custom_call.1} parent=1 // loop_body
      %s20 = ssub.s32 %s15, 1
      %s21 = ssub.s32 %s15, 2
      %s22 = sadd.s32 %s15, 1
      %s23 = ssub.s32 %s15, %s22
      %p24 = scmp.eq.s32.totalorder %s23, 0
      %s26 = sadd.s32 %s25, 1
      %s27 = scalar_select %p24, %s25, %s26
      %p30 = pneg %p24
      %p31 = scmp.eq.s32.totalorder %s15, 1
      %p32 = por %p30, %p31
      %p33 = scmp.ne.s32.totalorder %s25, %s28
      %p34 = scmp.eq.s32.totalorder %s15, 0
      %p35 = por %p33, %p34
      %p36 = scmp.ne.s32.totalorder %s25, %s28
      %p37 = scmp.eq.s32.totalorder %s20, 1
      %p38 = por %p36, %p37
      %p39 = scmp.ne.s32.totalorder %s28, %s29
      %p40 = scmp.eq.s32.totalorder %s20, 0
      %p41 = por %p39, %p40
      %p42 = scmp.ne.s32.totalorder %s28, %s29
      %p43 = scmp.eq.s32.totalorder %s21, 1
      %p44 = por %p42, %p43
      %p46 = scmp.ne.s32.totalorder %s29, %s45
      %p47 = scmp.eq.s32.totalorder %s21, 0
      %p48 = por %p46, %p47
      %s50 = sadd.s32 %s49, 1
      %p53 = scmp.eq.s32.totalorder %s15, 1
      %p54 = scmp.ne.s32.totalorder %s49, %s51
      %p55 = scmp.eq.s32.totalorder %s15, 0
      %p56 = por %p54, %p55
      %p57 = scmp.ne.s32.totalorder %s49, %s51
      %p58 = scmp.eq.s32.totalorder %s20, 1
      %p59 = por %p57, %p58
      %p60 = scmp.ne.s32.totalorder %s51, %s52
      %p61 = scmp.eq.s32.totalorder %s20, 0
      %p62 = por %p60, %p61
      %p63 = scmp.ne.s32.totalorder %s51, %s52
      %p64 = scmp.eq.s32.totalorder %s21, 1
      %p65 = por %p63, %p64
      %p67 = scmp.ne.s32.totalorder %s52, %s66
      %p68 = scmp.eq.s32.totalorder %s21, 0
      %p69 = por %p67, %p68
      %s71 = sadd.s32 %s70, 1
      %p74 = scmp.eq.s32.totalorder %s15, 1
      %p75 = scmp.ne.s32.totalorder %s70, %s72
      %p76 = scmp.eq.s32.totalorder %s15, 0
      %p77 = por %p75, %p76
      %p78 = scmp.ne.s32.totalorder %s70, %s72
      %p79 = scmp.eq.s32.totalorder %s20, 1
      %p80 = por %p78, %p79
      %p81 = scmp.ne.s32.totalorder %s72, %s73
      %p82 = scmp.eq.s32.totalorder %s20, 0
      %p83 = por %p81, %p82
      %p84 = scmp.ne.s32.totalorder %s72, %s73
      %p85 = scmp.eq.s32.totalorder %s21, 1
      %p86 = por %p84, %p85
      %p88 = scmp.ne.s32.totalorder %s73, %s87
      %p89 = scmp.eq.s32.totalorder %s21, 0
      %p90 = por %p88, %p89
      %s92 = sadd.s32 %s91, 1
      %p95 = scmp.eq.s32.totalorder %s15, 1
      %p96 = scmp.ne.s32.totalorder %s91, %s93
      %p97 = scmp.eq.s32.totalorder %s15, 0
      %p98 = por %p96, %p97
      %p99 = scmp.ne.s32.totalorder %s91, %s93
      %p100 = scmp.eq.s32.totalorder %s20, 1
      %p101 = por %p99, %p100
      %p102 = scmp.ne.s32.totalorder %s93, %s94
      %p103 = scmp.eq.s32.totalorder %s20, 0
      %p104 = por %p102, %p103
      %p105 = scmp.ne.s32.totalorder %s93, %s94
      %p106 = scmp.eq.s32.totalorder %s21, 1
      %p107 = por %p105, %p106
      %p109 = scmp.ne.s32.totalorder %s94, %s108
      %p110 = scmp.eq.s32.totalorder %s21, 0
      %p111 = por %p109, %p110
      %s113 = sadd.s32 %s112, 1
      %p116 = scmp.eq.s32.totalorder %s15, 1
      %p117 = scmp.ne.s32.totalorder %s112, %s114
      %p118 = scmp.eq.s32.totalorder %s15, 0
      %p119 = por %p117, %p118
      %p120 = scmp.ne.s32.totalorder %s112, %s114
      %p121 = scmp.eq.s32.totalorder %s20, 1
      %p122 = por %p120, %p121
      %p123 = scmp.ne.s32.totalorder %s114, %s115
      %p124 = scmp.eq.s32.totalorder %s20, 0
      %p125 = por %p123, %p124
      %p126 = scmp.ne.s32.totalorder %s114, %s115
      %p127 = scmp.eq.s32.totalorder %s21, 1
      %p128 = por %p126, %p127
      %p130 = scmp.ne.s32.totalorder %s115, %s129
      %p131 = scmp.eq.s32.totalorder %s21, 0
      %p132 = por %p130, %p131
      %s134 = sadd.s32 %s133, 1
      %p137 = scmp.eq.s32.totalorder %s15, 1
      %p138 = scmp.ne.s32.totalorder %s133, %s135
      %p139 = scmp.eq.s32.totalorder %s15, 0
      %p140 = por %p138, %p139
      %p141 = scmp.ne.s32.totalorder %s133, %s135
      %p142 = scmp.eq.s32.totalorder %s20, 1
      %p143 = por %p141, %p142
      %p144 = scmp.ne.s32.totalorder %s135, %s136
      %p145 = scmp.eq.s32.totalorder %s20, 0
      %p146 = por %p144, %p145
      %p147 = scmp.ne.s32.totalorder %s135, %s136
      %p148 = scmp.eq.s32.totalorder %s21, 1
      %p149 = por %p147, %p148
      %p151 = scmp.ne.s32.totalorder %s136, %s150
      %p152 = scmp.eq.s32.totalorder %s21, 0
      %p153 = por %p151, %p152
      %s154 = ssub.s32 %s15, %s22
      %p155 = scmp.eq.s32.totalorder %s154, 0
      %s157 = sadd.s32 %s156, 1
      %s158 = scalar_select %p155, %s156, %s157
      %p161 = pneg %p155
      %p162 = scmp.eq.s32.totalorder %s15, 1
      %p163 = por %p161, %p162
      %p164 = scmp.ne.s32.totalorder %s156, %s159
      %p165 = scmp.eq.s32.totalorder %s15, 0
      %p166 = por %p164, %p165
      %p167 = scmp.ne.s32.totalorder %s156, %s159
      %p168 = scmp.eq.s32.totalorder %s20, 1
      %p169 = por %p167, %p168
      %p170 = scmp.ne.s32.totalorder %s159, %s160
      %p171 = scmp.eq.s32.totalorder %s20, 0
      %p172 = por %p170, %p171
      %p173 = scmp.ne.s32.totalorder %s159, %s160
      %p174 = scmp.eq.s32.totalorder %s21, 1
      %p175 = por %p173, %p174
      %p177 = scmp.ne.s32.totalorder %s160, %s176
      %p178 = scmp.eq.s32.totalorder %s21, 0
      %p179 = por %p177, %p178
      %p180 = scmp.le.s32.totalorder 1, %s15
      %p181 = scmp.lt.s32.totalorder %s15, 3
      %p182 = pnand %p180, %p181
      %p183 = pneg %p182
      // Predicated region
      $region9: #{tpu_custom_call.1} parent=5 // pred_check
        _
      $region10: #{tpu_custom_call.1} parent=5 // pred_check_branch
        %185 = sbr.rel (%p182) target = $region12
      $region11: #{tpu_custom_call.1} parent=5 // pred_region
        %s186 = ssub.s32 %s15, 1
        // Predicated region
        $region13: #{tpu_custom_call.1} parent=11 // pred_check
          %p187 = pneg %p62
        $region14: #{tpu_custom_call.1} parent=11 // pred_check_branch
          %189 = sbr.rel (%p187) target = $region16
        $region15: #{tpu_custom_call.1} parent=11 // pred_region
          _
        $region16: #{tpu_custom_call.1} parent=11 // pred_fallthru
          _
        // Predicated region
        $region17: #{tpu_custom_call.1} parent=11 // pred_check
          %p190 = pneg %p83
        $region18: #{tpu_custom_call.1} parent=11 // pred_check_branch
          %192 = sbr.rel (%p190) target = $region20
        $region19: #{tpu_custom_call.1} parent=11 // pred_region
          _
        $region20: #{tpu_custom_call.1} parent=11 // pred_fallthru
          _
        // Predicated region
        $region21: #{tpu_custom_call.1} parent=11 // pred_check
          %p193 = pneg %p104
        $region22: #{tpu_custom_call.1} parent=11 // pred_check_branch
          %195 = sbr.rel (%p193) target = $region24
        $region23: #{tpu_custom_call.1} parent=11 // pred_region
          _
        $region24: #{tpu_custom_call.1} parent=11 // pred_fallthru
          _
        // Predicated region
        $region25: #{tpu_custom_call.1} parent=11 // pred_check
          %p196 = pneg %p125
        $region26: #{tpu_custom_call.1} parent=11 // pred_check_branch
          %198 = sbr.rel (%p196) target = $region28
        $region27: #{tpu_custom_call.1} parent=11 // pred_region
          _
        $region28: #{tpu_custom_call.1} parent=11 // pred_fallthru
          _
        // Predicated region
        $region29: #{tpu_custom_call.1} parent=11 // pred_check
          %p199 = pneg %p146
        $region30: #{tpu_custom_call.1} parent=11 // pred_check_branch
          %201 = sbr.rel (%p199) target = $region32
        $region31: #{tpu_custom_call.1} parent=11 // pred_region
          _
        $region32: #{tpu_custom_call.1} parent=11 // pred_fallthru
          _
      $region12: #{tpu_custom_call.1} parent=5 // pred_fallthru
        _
      %p202 = scmp.lt.s32.totalorder %s15, 2
      // Predicated region
      $region33: #{tpu_custom_call.1} parent=5 // pred_check
        %p203 = pneg %p202
      $region34: #{tpu_custom_call.1} parent=5 // pred_check_branch
        %205 = sbr.rel (%p203) target = $region36
      $region35: #{tpu_custom_call.1} parent=5 // pred_region
        // Predicated region
        $region37: #{tpu_custom_call.1} parent=35 // pred_check
          %p206 = pneg %p35
        $region38: #{tpu_custom_call.1} parent=35 // pred_check_branch
          %208 = sbr.rel (%p206) target = $region40
        $region39: #{tpu_custom_call.1} parent=35 // pred_region
          %p209 = scmp.lt.s32.totalorder %s15, 1
          %s210 = scalar_select %p209, %s15, 1
          %s211 = smul.addr %s210, 8
          %s212 = scalar_lea.vmem %s0, %s211
        $region40: #{tpu_custom_call.1} parent=35 // pred_fallthru
          _
      $region36: #{tpu_custom_call.1} parent=5 // pred_fallthru
        _
      %p213 = scmp.le.s32.totalorder 1, %s15
      %p214 = scmp.lt.s32.totalorder %s15, 3
      %p215 = pnand %p213, %p214
      %p216 = pneg %p215
      // Predicated region
      $region41: #{tpu_custom_call.1} parent=5 // pred_check
        _
      $region42: #{tpu_custom_call.1} parent=5 // pred_check_branch
        %218 = sbr.rel (%p215) target = $region44
      $region43: #{tpu_custom_call.1} parent=5 // pred_region
        %s219 = ssub.s32 %s15, 1
        %p220 = scmp.lt.s32.totalorder %s20, 1
        %s221 = scalar_select %p220, %s20, 1
        %s222 = smul.addr %s221, 8
        %s223 = scalar_lea.vmem %s0, %s222
        %p224 = pneg %p41
        %p225 = pneg %p38
        %p226 = pneg %p62
        %p227 = pneg %p59
        %p228 = pneg %p83
        %p229 = pneg %p80
        %p230 = pneg %p104
        %p231 = pneg %p101
        %p232 = pneg %p125
        %p233 = pneg %p122
        %p234 = pneg %p146
        %p235 = pneg %p143
        %p236 = pneg %p172
        %p237 = pneg %p169
        %s238 = sand.u32 %s159, 1
        %s239 = scalar_lea.sflag [#allocation3], %s238
        %s240 = sand.u32 %s159, 1
        %s241 = smul.addr %s240, 8
        %s242 = scalar_lea.vmem [#allocation2], %s241
        %p243 = scmp.lt.s32.totalorder %s20, 1
        %s244 = scalar_select %p243, %s20, 1
        %s245 = smul.addr %s244, 8
        %s246 = scalar_lea.vmem %s0, %s245
        %v247 = vld [vmem:[%s1] sm:$0x1]
        %v248 = vld [vmem:[%s2] sm:$0x1]
        %v249 = vld [vmem:[%s3] sm:$0xff]
        %v250 = vld [vmem:[%s3 + $0x8] sm:$0xff]
        %v251 = vld [vmem:[%s3 + $0x10] sm:$0xff]
        %v252 = vld [vmem:[%s3 + $0x18] sm:$0xff]
        %v253 = vld [vmem:[%s3 + $0x20] sm:$0xff]
        %v254 = vld [vmem:[%s3 + $0x28] sm:$0xff]
        %v255 = vld [vmem:[%s3 + $0x30] sm:$0xff]
        %v256 = vld [vmem:[%s3 + $0x38] sm:$0xff]
        %v257 = vld [vmem:[%s4] sm:$0xff]
        %v258 = vld [vmem:[%s4 + $0x8] sm:$0xff]
        %v259 = vld [vmem:[%s4 + $0x10] sm:$0xff]
        %v260 = vld [vmem:[%s4 + $0x18] sm:$0xff]
        %v261 = vld [vmem:[%s4 + $0x20] sm:$0xff]
        %v262 = vld [vmem:[%s4 + $0x28] sm:$0xff]
        %v263 = vld [vmem:[%s4 + $0x30] sm:$0xff]
        %v264 = vld [vmem:[%s4 + $0x38] sm:$0xff]
        %v265 = vld [vmem:[%s5] sm:$0x1]
        %v266 = vld [vmem:[%s246] sm:$0xff]
        %vm267 = vcmask 261120
        %v268 = vsel %vm267, %v266, 0.0
        %269 = vadd.xlane.f32.xlu0 %v268
        %v270 = vpop.xlane.xlu0 %269
        %v271 = vrcp.pop 32.0
        %v272 = vmul.f32 %v270, %v271
        %v273 = vsub.f32 %v266, %v272
        %v274 = vmul.f32 %v273, %v273
        %v275 = vsel %vm267, %v274, 0.0
        %276 = vadd.xlane.f32.xlu0 %v275
        %v277 = vpop.xlane.xlu0 %276
        %v278 = vmul.f32 %v277, %v271
        %v279 = vadd.f32 %v278, 1e-05
        %v280 = vrsqrt.pop %v279
        %v281 = vmul.f32 %v273, %v280
        %v283 = vlaneseq
        %v284 = vshrl.u32 %v283, 7
        %v285 = vsub.s32 0, %v284
        %v286 = vrot.slane %v247, %v285
        %v288 = vmul.f32 %v281, %v286
        %v290 = vlaneseq
        %v291 = vshrl.u32 %v290, 7
        %v292 = vsub.s32 0, %v291
        %v293 = vrot.slane %v248, %v292
        %v295 = vadd.f32 %v288, %v293
        %v297 = vsel %vm267, %v295, 0
        %299 = vmatprep.subr.mxu0 %v250
        %300 = vmatpush1.msra.mxu0 %v249
        %301 = vmatprep.subr.mxu0 %v252
        %302 = vmatpush1.msra.mxu0 %v251
        %303 = vmatprep.subr.mxu0 %v254
        %304 = vmatpush1.msra.mxu0 %v253
        %305 = vmatprep.subr.mxu0 %v256
        %306 = vmatpush1.msra.mxu0 %v255
        %307 = vmatprep.subr.mxu0 0.0
        %308 = vmatpush1.msra.mxu0 0.0
        %309 = vmatprep.subr.mxu0 0.0
        %310 = vmatpush1.msra.mxu0 0.0
        %311 = vmatprep.subr.mxu0 0.0
        %312 = vmatpush1.msra.mxu0 0.0
        %313 = vmatprep.subr.mxu0 0.0
        %314 = vmatpush1.msra.mxu0 0.0
        %315 = vmatprep.subr.mxu0 0.0
        %316 = vmatpush1.msra.mxu0 0.0
        %317 = vmatprep.subr.mxu0 0.0
        %318 = vmatpush1.msra.mxu0 0.0
        %319 = vmatprep.subr.mxu0 0.0
        %320 = vmatpush1.msra.mxu0 0.0
        %321 = vmatprep.subr.mxu0 0.0
        %322 = vmatpush1.msra.mxu0 0.0
        %323 = vmatprep.subr.mxu0 0.0
        %324 = vmatpush1.msra.mxu0 0.0
        %325 = vmatprep.subr.mxu0 0.0
        %326 = vmatpush1.msra.mxu0 0.0
        %327 = vmatprep.subr.mxu0 0.0
        %328 = vmatpush1.msra.mxu0 0.0
        %329 = vmatprep.subr.mxu0 0.0
        %330 = vmatpush1.msra.mxu0 0.0
        %331 = vmatprep.subr.mxu0 0.0
        %332 = vmatpush1.msra.mxu0 0.0
        %333 = vmatprep.subr.mxu0 0.0
        %334 = vmatpush1.msra.mxu0 0.0
        %335 = vmatprep.subr.mxu0 0.0
        %336 = vmatpush1.msra.mxu0 0.0
        %337 = vmatprep.subr.mxu0 0.0
        %338 = vmatpush1.msra.mxu0 0.0
        %339 = vmatprep.subr.mxu0 0.0
        %340 = vmatpush1.msra.mxu0 0.0
        %341 = vmatprep.subr.mxu0 0.0
        %342 = vmatpush1.msra.mxu0 0.0
        %343 = vmatprep.subr.mxu0 0.0
        %344 = vmatpush1.msra.mxu0 0.0
        %345 = vmatprep.subr.mxu0 0.0
        %346 = vmatpush1.msra.mxu0 0.0
        %347 = vmatprep.subr.mxu0 0.0
        %348 = vmatpush1.msra.mxu0 0.0
        %349 = vmatprep.subr.mxu0 0.0
        %350 = vmatpush1.msra.mxu0 0.0
        %351 = vmatprep.subr.mxu0 0.0
        %352 = vmatpush1.msra.mxu0 0.0
        %353 = vmatprep.subr.mxu0 0.0
        %354 = vmatpush1.msra.mxu0 0.0
        %355 = vmatprep.subr.mxu0 0.0
        %356 = vmatpush1.msra.mxu0 0.0
        %357 = vmatprep.subr.mxu0 0.0
        %358 = vmatpush1.msra.mxu0 0.0
        %359 = vmatprep.subr.mxu0 0.0
        %360 = vmatpush1.msra.mxu0 0.0
        %361 = vmatprep.subr.mxu0 0.0
        %362 = vmatpush1.msra.mxu0 0.0
        %363 = vmatprep.mubr.f32.mxu0 0.0
        %364 = vmatmul.mubr.f32.gmra.mrb[0].mxu0 %v297
        %v365 = vpop.f32.mrb[0].mxu0
        %v366 = vadd.f32 0.0, %v365
        %v367 = vpop.f32.mrb[0].mxu0
        %v368 = vadd.f32 0.0, %v367
        %369 = vdwg.mxu0
        %371 = vrot.lane.b32.xlu0 %v366, 64
        %v372 = vpop.permute.xlu0 %371
        %vm373 = vcmask 130048
        %v374 = vsel %vm373, %v366, 0
        %v376 = vsel %vm373, %v372, 0
        %378 = vmatprep.subr.mxu0 0.0
        %379 = vmatpush1.xpose.msra.mxu0 %v376
        %380 = vmatprep.subr.mxu0 0.0
        %381 = vmatpush1.xpose.msra.mxu0 0.0
        %382 = vmatprep.subr.mxu0 0.0
        %383 = vmatpush1.xpose.msra.mxu0 0.0
        %384 = vmatprep.subr.mxu0 0.0
        %385 = vmatpush1.xpose.msra.mxu0 0.0
        %386 = vmatprep.subr.mxu0 0.0
        %387 = vmatpush1.xpose.msra.mxu0 0.0
        %388 = vmatprep.subr.mxu0 0.0
        %389 = vmatpush1.xpose.msra.mxu0 0.0
        %390 = vmatprep.subr.mxu0 0.0
        %391 = vmatpush1.xpose.msra.mxu0 0.0
        %392 = vmatprep.subr.mxu0 0.0
        %393 = vmatpush1.xpose.msra.mxu0 0.0
        %394 = vmatprep.subr.mxu0 0.0
        %395 = vmatpush1.xpose.msra.mxu0 0.0
        %396 = vmatprep.subr.mxu0 0.0
        %397 = vmatpush1.xpose.msra.mxu0 0.0
        %398 = vmatprep.subr.mxu0 0.0
        %399 = vmatpush1.xpose.msra.mxu0 0.0
        %400 = vmatprep.subr.mxu0 0.0
        %401 = vmatpush1.xpose.msra.mxu0 0.0
        %402 = vmatprep.subr.mxu0 0.0
        %403 = vmatpush1.xpose.msra.mxu0 0.0
        %404 = vmatprep.subr.mxu0 0.0
        %405 = vmatpush1.xpose.msra.mxu0 0.0
        %406 = vmatprep.subr.mxu0 0.0
        %407 = vmatpush1.xpose.msra.mxu0 0.0
        %408 = vmatprep.subr.mxu0 0.0
        %409 = vmatpush1.xpose.msra.mxu0 0.0
        %410 = vmatprep.subr.mxu0 0.0
        %411 = vmatpush1.xpose.msra.mxu0 0.0
        %412 = vmatprep.subr.mxu0 0.0
        %413 = vmatpush1.xpose.msra.mxu0 0.0
        %414 = vmatprep.subr.mxu0 0.0
        %415 = vmatpush1.xpose.msra.mxu0 0.0
        %416 = vmatprep.subr.mxu0 0.0
        %417 = vmatpush1.xpose.msra.mxu0 0.0
        %418 = vmatprep.subr.mxu0 0.0
        %419 = vmatpush1.xpose.msra.mxu0 0.0
        %420 = vmatprep.subr.mxu0 0.0
        %421 = vmatpush1.xpose.msra.mxu0 0.0
        %422 = vmatprep.subr.mxu0 0.0
        %423 = vmatpush1.xpose.msra.mxu0 0.0
        %424 = vmatprep.subr.mxu0 0.0
        %425 = vmatpush1.xpose.msra.mxu0 0.0
        %426 = vmatprep.subr.mxu0 0.0
        %427 = vmatpush1.xpose.msra.mxu0 0.0
        %428 = vmatprep.subr.mxu0 0.0
        %429 = vmatpush1.xpose.msra.mxu0 0.0
        %430 = vmatprep.subr.mxu0 0.0
        %431 = vmatpush1.xpose.msra.mxu0 0.0
        %432 = vmatprep.subr.mxu0 0.0
        %433 = vmatpush1.xpose.msra.mxu0 0.0
        %434 = vmatprep.subr.mxu0 0.0
        %435 = vmatpush1.xpose.msra.mxu0 0.0
        %436 = vmatprep.subr.mxu0 0.0
        %437 = vmatpush1.xpose.msra.mxu0 0.0
        %438 = vmatprep.subr.mxu0 0.0
        %439 = vmatpush1.xpose.msra.mxu0 0.0
        %440 = vmatprep.subr.mxu0 0.0
        %441 = vmatpush1.xpose.msra.mxu0 0.0
        %442 = vmatprep.mubr.f32.mxu0 0.0
        %443 = vmatmul.mubr.f32.gmra.mrb[0].mxu0 %v374
        %v444 = vpop.f32.mrb[0].mxu0
        %v445 = vadd.f32 0.0, %v444
        %v446 = vpop.f32.mrb[0].mxu0
        %447 = vdwg.mxu0
        %v448 = vmul.f32 %v445, 0.25
        %vm449 = vcmask 64512
        %v450 = vsel %vm449, %v448, -inf
        %451 = vmax.xlane.f32.xlu0 %v450
        %v452 = vpop.xlane.xlu0 %451
        %v453 = vsub.f32 %v448, %v452
        %v454 = vmul.f32 %v453, 1.442695
        %v455 = vpow.pop %v454
        %v456 = vsel %vm449, %v455, 0.0
        %457 = vadd.xlane.f32.xlu0 %v456
        %v458 = vpop.xlane.xlu0 %457
        %v459 = vrcp.pop %v458
        %v460 = vmul.f32 %v455, %v459
        %v462 = vsel %vm449, %v460, 0
        %464 = vmatprep.subr.mxu0 0.0
        %465 = vmatpush1.msra.mxu0 %v368
        %466 = vmatprep.subr.mxu0 0.0
        %467 = vmatpush1.msra.mxu0 0.0
        %468 = vmatprep.subr.mxu0 0.0
        %469 = vmatpush1.msra.mxu0 0.0
        %470 = vmatprep.subr.mxu0 0.0
        %471 = vmatpush1.msra.mxu0 0.0
        %472 = vmatprep.subr.mxu0 0.0
        %473 = vmatpush1.msra.mxu0 0.0
        %474 = vmatprep.subr.mxu0 0.0
        %475 = vmatpush1.msra.mxu0 0.0
        %476 = vmatprep.subr.mxu0 0.0
        %477 = vmatpush1.msra.mxu0 0.0
        %478 = vmatprep.subr.mxu0 0.0
        %479 = vmatpush1.msra.mxu0 0.0
        %480 = vmatprep.subr.mxu0 0.0
        %481 = vmatpush1.msra.mxu0 0.0
        %482 = vmatprep.subr.mxu0 0.0
        %483 = vmatpush1.msra.mxu0 0.0
        %484 = vmatprep.subr.mxu0 0.0
        %485 = vmatpush1.msra.mxu0 0.0
        %486 = vmatprep.subr.mxu0 0.0
        %487 = vmatpush1.msra.mxu0 0.0
        %488 = vmatprep.subr.mxu0 0.0
        %489 = vmatpush1.msra.mxu0 0.0
        %490 = vmatprep.subr.mxu0 0.0
        %491 = vmatpush1.msra.mxu0 0.0
        %492 = vmatprep.subr.mxu0 0.0
        %493 = vmatpush1.msra.mxu0 0.0
        %494 = vmatprep.subr.mxu0 0.0
        %495 = vmatpush1.msra.mxu0 0.0
        %496 = vmatprep.subr.mxu0 0.0
        %497 = vmatpush1.msra.mxu0 0.0
        %498 = vmatprep.subr.mxu0 0.0
        %499 = vmatpush1.msra.mxu0 0.0
        %500 = vmatprep.subr.mxu0 0.0
        %501 = vmatpush1.msra.mxu0 0.0
        %502 = vmatprep.subr.mxu0 0.0
        %503 = vmatpush1.msra.mxu0 0.0
        %504 = vmatprep.subr.mxu0 0.0
        %505 = vmatpush1.msra.mxu0 0.0
        %506 = vmatprep.subr.mxu0 0.0
        %507 = vmatpush1.msra.mxu0 0.0
        %508 = vmatprep.subr.mxu0 0.0
        %509 = vmatpush1.msra.mxu0 0.0
        %510 = vmatprep.subr.mxu0 0.0
        %511 = vmatpush1.msra.mxu0 0.0
        %512 = vmatprep.subr.mxu0 0.0
        %513 = vmatpush1.msra.mxu0 0.0
        %514 = vmatprep.subr.mxu0 0.0
        %515 = vmatpush1.msra.mxu0 0.0
        %516 = vmatprep.subr.mxu0 0.0
        %517 = vmatpush1.msra.mxu0 0.0
        %518 = vmatprep.subr.mxu0 0.0
        %519 = vmatpush1.msra.mxu0 0.0
        %520 = vmatprep.subr.mxu0 0.0
        %521 = vmatpush1.msra.mxu0 0.0
        %522 = vmatprep.subr.mxu0 0.0
        %523 = vmatpush1.msra.mxu0 0.0
        %524 = vmatprep.subr.mxu0 0.0
        %525 = vmatpush1.msra.mxu0 0.0
        %526 = vmatprep.subr.mxu0 0.0
        %527 = vmatpush1.msra.mxu0 0.0
        %528 = vmatprep.mubr.f32.mxu0 0.0
        %529 = vmatmul.mubr.f32.gmra.mrb[0].mxu0 %v462
        %v530 = vpop.f32.mrb[0].mxu0
        %v531 = vadd.f32 0.0, %v530
        %v532 = vpop.f32.mrb[0].mxu0
        %533 = vdwg.mxu0
        %534 = vrot.lane.b32.xlu0 %v366, 112
        %v535 = vpop.permute.xlu0 %534
        %536 = vrot.lane.b32.xlu0 %v366, 48
        %v537 = vpop.permute.xlu0 %536
        %v538 = vsel %vm373, %v535, 0
        %v540 = vsel %vm373, %v537, 0
        %542 = vmatprep.subr.mxu0 0.0
        %543 = vmatpush1.xpose.msra.mxu0 %v540
        %544 = vmatprep.subr.mxu0 0.0
        %545 = vmatpush1.xpose.msra.mxu0 0.0
        %546 = vmatprep.subr.mxu0 0.0
        %547 = vmatpush1.xpose.msra.mxu0 0.0
        %548 = vmatprep.subr.mxu0 0.0
        %549 = vmatpush1.xpose.msra.mxu0 0.0
        %550 = vmatprep.subr.mxu0 0.0
        %551 = vmatpush1.xpose.msra.mxu0 0.0
        %552 = vmatprep.subr.mxu0 0.0
        %553 = vmatpush1.xpose.msra.mxu0 0.0
        %554 = vmatprep.subr.mxu0 0.0
        %555 = vmatpush1.xpose.msra.mxu0 0.0
        %556 = vmatprep.subr.mxu0 0.0
        %557 = vmatpush1.xpose.msra.mxu0 0.0
        %558 = vmatprep.subr.mxu0 0.0
        %559 = vmatpush1.xpose.msra.mxu0 0.0
        %560 = vmatprep.subr.mxu0 0.0
        %561 = vmatpush1.xpose.msra.mxu0 0.0
        %562 = vmatprep.subr.mxu0 0.0
        %563 = vmatpush1.xpose.msra.mxu0 0.0
        %564 = vmatprep.subr.mxu0 0.0
        %565 = vmatpush1.xpose.msra.mxu0 0.0
        %566 = vmatprep.subr.mxu0 0.0
        %567 = vmatpush1.xpose.msra.mxu0 0.0
        %568 = vmatprep.subr.mxu0 0.0
        %569 = vmatpush1.xpose.msra.mxu0 0.0
        %570 = vmatprep.subr.mxu0 0.0
        %571 = vmatpush1.xpose.msra.mxu0 0.0
        %572 = vmatprep.subr.mxu0 0.0
        %573 = vmatpush1.xpose.msra.mxu0 0.0
        %574 = vmatprep.subr.mxu0 0.0
        %575 = vmatpush1.xpose.msra.mxu0 0.0
        %576 = vmatprep.subr.mxu0 0.0
        %577 = vmatpush1.xpose.msra.mxu0 0.0
        %578 = vmatprep.subr.mxu0 0.0
        %579 = vmatpush1.xpose.msra.mxu0 0.0
        %580 = vmatprep.subr.mxu0 0.0
        %581 = vmatpush1.xpose.msra.mxu0 0.0
        %582 = vmatprep.subr.mxu0 0.0
        %583 = vmatpush1.xpose.msra.mxu0 0.0
        %584 = vmatprep.subr.mxu0 0.0
        %585 = vmatpush1.xpose.msra.mxu0 0.0
        %586 = vmatprep.subr.mxu0 0.0
        %587 = vmatpush1.xpose.msra.mxu0 0.0
        %588 = vmatprep.subr.mxu0 0.0
        %589 = vmatpush1.xpose.msra.mxu0 0.0
        %590 = vmatprep.subr.mxu0 0.0
        %591 = vmatpush1.xpose.msra.mxu0 0.0
        %592 = vmatprep.subr.mxu0 0.0
        %593 = vmatpush1.xpose.msra.mxu0 0.0
        %594 = vmatprep.subr.mxu0 0.0
        %595 = vmatpush1.xpose.msra.mxu0 0.0
        %596 = vmatprep.subr.mxu0 0.0
        %597 = vmatpush1.xpose.msra.mxu0 0.0
        %598 = vmatprep.subr.mxu0 0.0
        %599 = vmatpush1.xpose.msra.mxu0 0.0
        %600 = vmatprep.subr.mxu0 0.0
        %601 = vmatpush1.xpose.msra.mxu0 0.0
        %602 = vmatprep.subr.mxu0 0.0
        %603 = vmatpush1.xpose.msra.mxu0 0.0
        %604 = vmatprep.subr.mxu0 0.0
        %605 = vmatpush1.xpose.msra.mxu0 0.0
        %606 = vmatprep.mubr.f32.mxu0 0.0
        %607 = vmatmul.mubr.f32.gmra.mrb[0].mxu0 %v538
        %v608 = vpop.f32.mrb[0].mxu0
        %v609 = vadd.f32 0.0, %v608
        %v610 = vpop.f32.mrb[0].mxu0
        %611 = vdwg.mxu0
        %v612 = vmul.f32 %v609, 0.25
        %v613 = vsel %vm449, %v612, -inf
        %614 = vmax.xlane.f32.xlu0 %v613
        %v615 = vpop.xlane.xlu0 %614
        %v616 = vsub.f32 %v612, %v615
        %v617 = vmul.f32 %v616, 1.442695
        %v618 = vpow.pop %v617
        %v619 = vsel %vm449, %v618, 0.0
        %620 = vadd.xlane.f32.xlu0 %v619
        %v621 = vpop.xlane.xlu0 %620
        %v622 = vrcp.pop %v621
        %v623 = vmul.f32 %v618, %v622
        %625 = vrot.lane.b32.xlu0 %v368, 112
        %v626 = vpop.permute.xlu0 %625
        %v629 = vsel %vm449, %v623, 0
        %631 = vmatprep.subr.mxu0 0.0
        %632 = vmatpush1.msra.mxu0 %v626
        %633 = vmatprep.subr.mxu0 0.0
        %634 = vmatpush1.msra.mxu0 0.0
        %635 = vmatprep.subr.mxu0 0.0
        %636 = vmatpush1.msra.mxu0 0.0
        %637 = vmatprep.subr.mxu0 0.0
        %638 = vmatpush1.msra.mxu0 0.0
        %639 = vmatprep.subr.mxu0 0.0
        %640 = vmatpush1.msra.mxu0 0.0
        %641 = vmatprep.subr.mxu0 0.0
        %642 = vmatpush1.msra.mxu0 0.0
        %643 = vmatprep.subr.mxu0 0.0
        %644 = vmatpush1.msra.mxu0 0.0
        %645 = vmatprep.subr.mxu0 0.0
        %646 = vmatpush1.msra.mxu0 0.0
        %647 = vmatprep.subr.mxu0 0.0
        %648 = vmatpush1.msra.mxu0 0.0
        %649 = vmatprep.subr.mxu0 0.0
        %650 = vmatpush1.msra.mxu0 0.0
        %651 = vmatprep.subr.mxu0 0.0
        %652 = vmatpush1.msra.mxu0 0.0
        %653 = vmatprep.subr.mxu0 0.0
        %654 = vmatpush1.msra.mxu0 0.0
        %655 = vmatprep.subr.mxu0 0.0
        %656 = vmatpush1.msra.mxu0 0.0
        %657 = vmatprep.subr.mxu0 0.0
        %658 = vmatpush1.msra.mxu0 0.0
        %659 = vmatprep.subr.mxu0 0.0
        %660 = vmatpush1.msra.mxu0 0.0
        %661 = vmatprep.subr.mxu0 0.0
        %662 = vmatpush1.msra.mxu0 0.0
        %663 = vmatprep.subr.mxu0 0.0
        %664 = vmatpush1.msra.mxu0 0.0
        %665 = vmatprep.subr.mxu0 0.0
        %666 = vmatpush1.msra.mxu0 0.0
        %667 = vmatprep.subr.mxu0 0.0
        %668 = vmatpush1.msra.mxu0 0.0
        %669 = vmatprep.subr.mxu0 0.0
        %670 = vmatpush1.msra.mxu0 0.0
        %671 = vmatprep.subr.mxu0 0.0
        %672 = vmatpush1.msra.mxu0 0.0
        %673 = vmatprep.subr.mxu0 0.0
        %674 = vmatpush1.msra.mxu0 0.0
        %675 = vmatprep.subr.mxu0 0.0
        %676 = vmatpush1.msra.mxu0 0.0
        %677 = vmatprep.subr.mxu0 0.0
        %678 = vmatpush1.msra.mxu0 0.0
        %679 = vmatprep.subr.mxu0 0.0
        %680 = vmatpush1.msra.mxu0 0.0
        %681 = vmatprep.subr.mxu0 0.0
        %682 = vmatpush1.msra.mxu0 0.0
        %683 = vmatprep.subr.mxu0 0.0
        %684 = vmatpush1.msra.mxu0 0.0
        %685 = vmatprep.subr.mxu0 0.0
        %686 = vmatpush1.msra.mxu0 0.0
        %687 = vmatprep.subr.mxu0 0.0
        %688 = vmatpush1.msra.mxu0 0.0
        %689 = vmatprep.subr.mxu0 0.0
        %690 = vmatpush1.msra.mxu0 0.0
        %691 = vmatprep.subr.mxu0 0.0
        %692 = vmatpush1.msra.mxu0 0.0
        %693 = vmatprep.subr.mxu0 0.0
        %694 = vmatpush1.msra.mxu0 0.0
        %695 = vmatprep.mubr.f32.mxu0 0.0
        %696 = vmatmul.mubr.f32.gmra.mrb[0].mxu0 %v629
        %v697 = vpop.f32.mrb[0].mxu0
        %v698 = vadd.f32 0.0, %v697
        %v699 = vpop.f32.mrb[0].mxu0
        %700 = vdwg.mxu0
        %v702 = vsel %vm373, %v698, 0
        %704 = vmatprep.subr.mxu0 0.0
        %705 = vmatpush1.msra.mxu0 %v259
        %706 = vmatprep.subr.mxu0 0.0
        %707 = vmatpush1.msra.mxu0 %v260
        %708 = vmatprep.subr.mxu0 0.0
        %709 = vmatpush1.msra.mxu0 0.0
        %710 = vmatprep.subr.mxu0 0.0
        %711 = vmatpush1.msra.mxu0 0.0
        %712 = vmatprep.subr.mxu0 0.0
        %713 = vmatpush1.msra.mxu0 0.0
        %714 = vmatprep.subr.mxu0 0.0
        %715 = vmatpush1.msra.mxu0 0.0
        %716 = vmatprep.subr.mxu0 0.0
        %717 = vmatpush1.msra.mxu0 0.0
        %718 = vmatprep.subr.mxu0 0.0
        %719 = vmatpush1.msra.mxu0 0.0
        %720 = vmatprep.subr.mxu0 0.0
        %721 = vmatpush1.msra.mxu0 0.0
        %722 = vmatprep.subr.mxu0 0.0
        %723 = vmatpush1.msra.mxu0 0.0
        %724 = vmatprep.subr.mxu0 0.0
        %725 = vmatpush1.msra.mxu0 0.0
        %726 = vmatprep.subr.mxu0 0.0
        %727 = vmatpush1.msra.mxu0 0.0
        %728 = vmatprep.subr.mxu0 0.0
        %729 = vmatpush1.msra.mxu0 0.0
        %730 = vmatprep.subr.mxu0 0.0
        %731 = vmatpush1.msra.mxu0 0.0
        %732 = vmatprep.subr.mxu0 0.0
        %733 = vmatpush1.msra.mxu0 0.0
        %734 = vmatprep.subr.mxu0 0.0
        %735 = vmatpush1.msra.mxu0 0.0
        %736 = vmatprep.subr.mxu0 0.0
        %737 = vmatpush1.msra.mxu0 0.0
        %738 = vmatprep.subr.mxu0 0.0
        %739 = vmatpush1.msra.mxu0 0.0
        %740 = vmatprep.subr.mxu0 0.0
        %741 = vmatpush1.msra.mxu0 0.0
        %742 = vmatprep.subr.mxu0 0.0
        %743 = vmatpush1.msra.mxu0 0.0
        %744 = vmatprep.subr.mxu0 0.0
        %745 = vmatpush1.msra.mxu0 0.0
        %746 = vmatprep.subr.mxu0 0.0
        %747 = vmatpush1.msra.mxu0 0.0
        %748 = vmatprep.subr.mxu0 0.0
        %749 = vmatpush1.msra.mxu0 0.0
        %750 = vmatprep.subr.mxu0 0.0
        %751 = vmatpush1.msra.mxu0 0.0
        %752 = vmatprep.subr.mxu0 0.0
        %753 = vmatpush1.msra.mxu0 0.0
        %754 = vmatprep.subr.mxu0 0.0
        %755 = vmatpush1.msra.mxu0 0.0
        %756 = vmatprep.subr.mxu0 0.0
        %757 = vmatpush1.msra.mxu0 0.0
        %758 = vmatprep.subr.mxu0 0.0
        %759 = vmatpush1.msra.mxu0 0.0
        %760 = vmatprep.subr.mxu0 0.0
        %761 = vmatpush1.msra.mxu0 0.0
        %762 = vmatprep.subr.mxu0 0.0
        %763 = vmatpush1.msra.mxu0 0.0
        %764 = vmatprep.subr.mxu0 0.0
        %765 = vmatpush1.msra.mxu0 0.0
        %766 = vmatprep.subr.mxu0 0.0
        %767 = vmatpush1.msra.mxu0 0.0
        %768 = vmatprep.mubr.f32.mxu0 0.0
        %769 = vmatmul.mubr.f32.gmra.mrb[0].mxu0 %v702
        %v770 = vpop.f32.mrb[0].mxu0
        %v771 = vadd.f32 0.0, %v770
        %v772 = vpop.f32.mrb[0].mxu0
        %773 = vdwg.mxu0
        %v775 = vsel %vm373, %v531, 0
        %777 = vmatprep.subr.mxu0 0.0
        %778 = vmatpush1.msra.mxu0 %v257
        %779 = vmatprep.subr.mxu0 0.0
        %780 = vmatpush1.msra.mxu0 %v258
        %781 = vmatprep.subr.mxu0 0.0
        %782 = vmatpush1.msra.mxu0 0.0
        %783 = vmatprep.subr.mxu0 0.0
        %784 = vmatpush1.msra.mxu0 0.0
        %785 = vmatprep.subr.mxu0 0.0
        %786 = vmatpush1.msra.mxu0 0.0
        %787 = vmatprep.subr.mxu0 0.0
        %788 = vmatpush1.msra.mxu0 0.0
        %789 = vmatprep.subr.mxu0 0.0
        %790 = vmatpush1.msra.mxu0 0.0
        %791 = vmatprep.subr.mxu0 0.0
        %792 = vmatpush1.msra.mxu0 0.0
        %793 = vmatprep.subr.mxu0 0.0
        %794 = vmatpush1.msra.mxu0 0.0
        %795 = vmatprep.subr.mxu0 0.0
        %796 = vmatpush1.msra.mxu0 0.0
        %797 = vmatprep.subr.mxu0 0.0
        %798 = vmatpush1.msra.mxu0 0.0
        %799 = vmatprep.subr.mxu0 0.0
        %800 = vmatpush1.msra.mxu0 0.0
        %801 = vmatprep.subr.mxu0 0.0
        %802 = vmatpush1.msra.mxu0 0.0
        %803 = vmatprep.subr.mxu0 0.0
        %804 = vmatpush1.msra.mxu0 0.0
        %805 = vmatprep.subr.mxu0 0.0
        %806 = vmatpush1.msra.mxu0 0.0
        %807 = vmatprep.subr.mxu0 0.0
        %808 = vmatpush1.msra.mxu0 0.0
        %809 = vmatprep.subr.mxu0 0.0
        %810 = vmatpush1.msra.mxu0 0.0
        %811 = vmatprep.subr.mxu0 0.0
        %812 = vmatpush1.msra.mxu0 0.0
        %813 = vmatprep.subr.mxu0 0.0
        %814 = vmatpush1.msra.mxu0 0.0
        %815 = vmatprep.subr.mxu0 0.0
        %816 = vmatpush1.msra.mxu0 0.0
        %817 = vmatprep.subr.mxu0 0.0
        %818 = vmatpush1.msra.mxu0 0.0
        %819 = vmatprep.subr.mxu0 0.0
        %820 = vmatpush1.msra.mxu0 0.0
        %821 = vmatprep.subr.mxu0 0.0
        %822 = vmatpush1.msra.mxu0 0.0
        %823 = vmatprep.subr.mxu0 0.0
        %824 = vmatpush1.msra.mxu0 0.0
        %825 = vmatprep.subr.mxu0 0.0
        %826 = vmatpush1.msra.mxu0 0.0
        %827 = vmatprep.subr.mxu0 0.0
        %828 = vmatpush1.msra.mxu0 0.0
        %829 = vmatprep.subr.mxu0 0.0
        %830 = vmatpush1.msra.mxu0 0.0
        %831 = vmatprep.subr.mxu0 0.0
        %832 = vmatpush1.msra.mxu0 0.0
        %833 = vmatprep.subr.mxu0 0.0
        %834 = vmatpush1.msra.mxu0 0.0
        %835 = vmatprep.subr.mxu0 0.0
        %836 = vmatpush1.msra.mxu0 0.0
        %837 = vmatprep.subr.mxu0 0.0
        %838 = vmatpush1.msra.mxu0 0.0
        %839 = vmatprep.subr.mxu0 0.0
        %840 = vmatpush1.msra.mxu0 0.0
        %841 = vmatprep.mubr.f32.mxu0 0.0
        %842 = vmatmul.mubr.f32.gmra.mrb[0].mxu0 %v775
        %v843 = vpop.f32.mrb[0].mxu0
        %v844 = vadd.f32 %v771, %v843
        %v845 = vpop.f32.mrb[0].mxu0
        %846 = vdwg.mxu0
        %847 = vrot.lane.b32.xlu0 %v366, 96
        %v848 = vpop.permute.xlu0 %847
        %849 = vrot.lane.b32.xlu0 %v366, 32
        %v850 = vpop.permute.xlu0 %849
        %v851 = vsel %vm373, %v848, 0
        %v853 = vsel %vm373, %v850, 0
        %855 = vmatprep.subr.mxu0 0.0
        %856 = vmatpush1.xpose.msra.mxu0 %v853
        %857 = vmatprep.subr.mxu0 0.0
        %858 = vmatpush1.xpose.msra.mxu0 0.0
        %859 = vmatprep.subr.mxu0 0.0
        %860 = vmatpush1.xpose.msra.mxu0 0.0
        %861 = vmatprep.subr.mxu0 0.0
        %862 = vmatpush1.xpose.msra.mxu0 0.0
        %863 = vmatprep.subr.mxu0 0.0
        %864 = vmatpush1.xpose.msra.mxu0 0.0
        %865 = vmatprep.subr.mxu0 0.0
        %866 = vmatpush1.xpose.msra.mxu0 0.0
        %867 = vmatprep.subr.mxu0 0.0
        %868 = vmatpush1.xpose.msra.mxu0 0.0
        %869 = vmatprep.subr.mxu0 0.0
        %870 = vmatpush1.xpose.msra.mxu0 0.0
        %871 = vmatprep.subr.mxu0 0.0
        %872 = vmatpush1.xpose.msra.mxu0 0.0
        %873 = vmatprep.subr.mxu0 0.0
        %874 = vmatpush1.xpose.msra.mxu0 0.0
        %875 = vmatprep.subr.mxu0 0.0
        %876 = vmatpush1.xpose.msra.mxu0 0.0
        %877 = vmatprep.subr.mxu0 0.0
        %878 = vmatpush1.xpose.msra.mxu0 0.0
        %879 = vmatprep.subr.mxu0 0.0
        %880 = vmatpush1.xpose.msra.mxu0 0.0
        %881 = vmatprep.subr.mxu0 0.0
        %882 = vmatpush1.xpose.msra.mxu0 0.0
        %883 = vmatprep.subr.mxu0 0.0
        %884 = vmatpush1.xpose.msra.mxu0 0.0
        %885 = vmatprep.subr.mxu0 0.0
        %886 = vmatpush1.xpose.msra.mxu0 0.0
        %887 = vmatprep.subr.mxu0 0.0
        %888 = vmatpush1.xpose.msra.mxu0 0.0
        %889 = vmatprep.subr.mxu0 0.0
        %890 = vmatpush1.xpose.msra.mxu0 0.0
        %891 = vmatprep.subr.mxu0 0.0
        %892 = vmatpush1.xpose.msra.mxu0 0.0
        %893 = vmatprep.subr.mxu0 0.0
        %894 = vmatpush1.xpose.msra.mxu0 0.0
        %895 = vmatprep.subr.mxu0 0.0
        %896 = vmatpush1.xpose.msra.mxu0 0.0
        %897 = vmatprep.subr.mxu0 0.0
        %898 = vmatpush1.xpose.msra.mxu0 0.0
        %899 = vmatprep.subr.mxu0 0.0
        %900 = vmatpush1.xpose.msra.mxu0 0.0
        %901 = vmatprep.subr.mxu0 0.0
        %902 = vmatpush1.xpose.msra.mxu0 0.0
        %903 = vmatprep.subr.mxu0 0.0
        %904 = vmatpush1.xpose.msra.mxu0 0.0
        %905 = vmatprep.subr.mxu0 0.0
        %906 = vmatpush1.xpose.msra.mxu0 0.0
        %907 = vmatprep.subr.mxu0 0.0
        %908 = vmatpush1.xpose.msra.mxu0 0.0
        %909 = vmatprep.subr.mxu0 0.0
        %910 = vmatpush1.xpose.msra.mxu0 0.0
        %911 = vmatprep.subr.mxu0 0.0
        %912 = vmatpush1.xpose.msra.mxu0 0.0
        %913 = vmatprep.subr.mxu0 0.0
        %914 = vmatpush1.xpose.msra.mxu0 0.0
        %915 = vmatprep.subr.mxu0 0.0
        %916 = vmatpush1.xpose.msra.mxu0 0.0
        %917 = vmatprep.subr.mxu0 0.0
        %918 = vmatpush1.xpose.msra.mxu0 0.0
        %919 = vmatprep.mubr.f32.mxu0 0.0
        %920 = vmatmul.mubr.f32.gmra.mrb[0].mxu0 %v851
        %v921 = vpop.f32.mrb[0].mxu0
        %v922 = vadd.f32 0.0, %v921
        %v923 = vpop.f32.mrb[0].mxu0
        %924 = vdwg.mxu0
        %v925 = vmul.f32 %v922, 0.25
        %v926 = vsel %vm449, %v925, -inf
        %927 = vmax.xlane.f32.xlu0 %v926
        %v928 = vpop.xlane.xlu0 %927
        %v929 = vsub.f32 %v925, %v928
        %v930 = vmul.f32 %v929, 1.442695
        %v931 = vpow.pop %v930
        %v932 = vsel %vm449, %v931, 0.0
        %933 = vadd.xlane.f32.xlu0 %v932
        %v934 = vpop.xlane.xlu0 %933
        %v935 = vrcp.pop %v934
        %v936 = vmul.f32 %v931, %v935
        %937 = vrot.lane.b32.xlu0 %v368, 96
        %v938 = vpop.permute.xlu0 %937
        %v941 = vsel %vm449, %v936, 0
        %943 = vmatprep.subr.mxu0 0.0
        %944 = vmatpush1.msra.mxu0 %v938
        %945 = vmatprep.subr.mxu0 0.0
        %946 = vmatpush1.msra.mxu0 0.0
        %947 = vmatprep.subr.mxu0 0.0
        %948 = vmatpush1.msra.mxu0 0.0
        %949 = vmatprep.subr.mxu0 0.0
        %950 = vmatpush1.msra.mxu0 0.0
        %951 = vmatprep.subr.mxu0 0.0
        %952 = vmatpush1.msra.mxu0 0.0
        %953 = vmatprep.subr.mxu0 0.0
        %954 = vmatpush1.msra.mxu0 0.0
        %955 = vmatprep.subr.mxu0 0.0
        %956 = vmatpush1.msra.mxu0 0.0
        %957 = vmatprep.subr.mxu0 0.0
        %958 = vmatpush1.msra.mxu0 0.0
        %959 = vmatprep.subr.mxu0 0.0
        %960 = vmatpush1.msra.mxu0 0.0
        %961 = vmatprep.subr.mxu0 0.0
        %962 = vmatpush1.msra.mxu0 0.0
        %963 = vmatprep.subr.mxu0 0.0
        %964 = vmatpush1.msra.mxu0 0.0
        %965 = vmatprep.subr.mxu0 0.0
        %966 = vmatpush1.msra.mxu0 0.0
        %967 = vmatprep.subr.mxu0 0.0
        %968 = vmatpush1.msra.mxu0 0.0
        %969 = vmatprep.subr.mxu0 0.0
        %970 = vmatpush1.msra.mxu0 0.0
        %971 = vmatprep.subr.mxu0 0.0
        %972 = vmatpush1.msra.mxu0 0.0
        %973 = vmatprep.subr.mxu0 0.0
        %974 = vmatpush1.msra.mxu0 0.0
        %975 = vmatprep.subr.mxu0 0.0
        %976 = vmatpush1.msra.mxu0 0.0
        %977 = vmatprep.subr.mxu0 0.0
        %978 = vmatpush1.msra.mxu0 0.0
        %979 = vmatprep.subr.mxu0 0.0
        %980 = vmatpush1.msra.mxu0 0.0
        %981 = vmatprep.subr.mxu0 0.0
        %982 = vmatpush1.msra.mxu0 0.0
        %983 = vmatprep.subr.mxu0 0.0
        %984 = vmatpush1.msra.mxu0 0.0
        %985 = vmatprep.subr.mxu0 0.0
        %986 = vmatpush1.msra.mxu0 0.0
        %987 = vmatprep.subr.mxu0 0.0
        %988 = vmatpush1.msra.mxu0 0.0
        %989 = vmatprep.subr.mxu0 0.0
        %990 = vmatpush1.msra.mxu0 0.0
        %991 = vmatprep.subr.mxu0 0.0
        %992 = vmatpush1.msra.mxu0 0.0
        %993 = vmatprep.subr.mxu0 0.0
        %994 = vmatpush1.msra.mxu0 0.0
        %995 = vmatprep.subr.mxu0 0.0
        %996 = vmatpush1.msra.mxu0 0.0
        %997 = vmatprep.subr.mxu0 0.0
        %998 = vmatpush1.msra.mxu0 0.0
        %999 = vmatprep.subr.mxu0 0.0
        %1000 = vmatpush1.msra.mxu0 0.0
        %1001 = vmatprep.subr.mxu0 0.0
        %1002 = vmatpush1.msra.mxu0 0.0
        %1003 = vmatprep.subr.mxu0 0.0
        %1004 = vmatpush1.msra.mxu0 0.0
        %1005 = vmatprep.subr.mxu0 0.0
        %1006 = vmatpush1.msra.mxu0 0.0
        %1007 = vmatprep.mubr.f32.mxu0 0.0
        %1008 = vmatmul.mubr.f32.gmra.mrb[0].mxu0 %v941
        %v1009 = vpop.f32.mrb[0].mxu0
        %v1010 = vadd.f32 0.0, %v1009
        %v1011 = vpop.f32.mrb[0].mxu0
        %1012 = vdwg.mxu0
        %v1014 = vsel %vm373, %v1010, 0
        %1016 = vmatprep.subr.mxu0 0.0
        %1017 = vmatpush1.msra.mxu0 %v261
        %1018 = vmatprep.subr.mxu0 0.0
        %1019 = vmatpush1.msra.mxu0 %v262
        %1020 = vmatprep.subr.mxu0 0.0
        %1021 = vmatpush1.msra.mxu0 0.0
        %1022 = vmatprep.subr.mxu0 0.0
        %1023 = vmatpush1.msra.mxu0 0.0
        %1024 = vmatprep.subr.mxu0 0.0
        %1025 = vmatpush1.msra.mxu0 0.0
        %1026 = vmatprep.subr.mxu0 0.0
        %1027 = vmatpush1.msra.mxu0 0.0
        %1028 = vmatprep.subr.mxu0 0.0
        %1029 = vmatpush1.msra.mxu0 0.0
        %1030 = vmatprep.subr.mxu0 0.0
        %1031 = vmatpush1.msra.mxu0 0.0
        %1032 = vmatprep.subr.mxu0 0.0
        %1033 = vmatpush1.msra.mxu0 0.0
        %1034 = vmatprep.subr.mxu0 0.0
        %1035 = vmatpush1.msra.mxu0 0.0
        %1036 = vmatprep.subr.mxu0 0.0
        %1037 = vmatpush1.msra.mxu0 0.0
        %1038 = vmatprep.subr.mxu0 0.0
        %1039 = vmatpush1.msra.mxu0 0.0
        %1040 = vmatprep.subr.mxu0 0.0
        %1041 = vmatpush1.msra.mxu0 0.0
        %1042 = vmatprep.subr.mxu0 0.0
        %1043 = vmatpush1.msra.mxu0 0.0
        %1044 = vmatprep.subr.mxu0 0.0
        %1045 = vmatpush1.msra.mxu0 0.0
        %1046 = vmatprep.subr.mxu0 0.0
        %1047 = vmatpush1.msra.mxu0 0.0
        %1048 = vmatprep.subr.mxu0 0.0
        %1049 = vmatpush1.msra.mxu0 0.0
        %1050 = vmatprep.subr.mxu0 0.0
        %1051 = vmatpush1.msra.mxu0 0.0
        %1052 = vmatprep.subr.mxu0 0.0
        %1053 = vmatpush1.msra.mxu0 0.0
        %1054 = vmatprep.subr.mxu0 0.0
        %1055 = vmatpush1.msra.mxu0 0.0
        %1056 = vmatprep.subr.mxu0 0.0
        %1057 = vmatpush1.msra.mxu0 0.0
        %1058 = vmatprep.subr.mxu0 0.0
        %1059 = vmatpush1.msra.mxu0 0.0
        %1060 = vmatprep.subr.mxu0 0.0
        %1061 = vmatpush1.msra.mxu0 0.0
        %1062 = vmatprep.subr.mxu0 0.0
        %1063 = vmatpush1.msra.mxu0 0.0
        %1064 = vmatprep.subr.mxu0 0.0
        %1065 = vmatpush1.msra.mxu0 0.0
        %1066 = vmatprep.subr.mxu0 0.0
        %1067 = vmatpush1.msra.mxu0 0.0
        %1068 = vmatprep.subr.mxu0 0.0
        %1069 = vmatpush1.msra.mxu0 0.0
        %1070 = vmatprep.subr.mxu0 0.0
        %1071 = vmatpush1.msra.mxu0 0.0
        %1072 = vmatprep.subr.mxu0 0.0
        %1073 = vmatpush1.msra.mxu0 0.0
        %1074 = vmatprep.subr.mxu0 0.0
        %1075 = vmatpush1.msra.mxu0 0.0
        %1076 = vmatprep.subr.mxu0 0.0
        %1077 = vmatpush1.msra.mxu0 0.0
        %1078 = vmatprep.subr.mxu0 0.0
        %1079 = vmatpush1.msra.mxu0 0.0
        %1080 = vmatprep.mubr.f32.mxu0 0.0
        %1081 = vmatmul.mubr.f32.gmra.mrb[0].mxu0 %v1014
        %v1082 = vpop.f32.mrb[0].mxu0
        %v1083 = vadd.f32 0.0, %v1082
        %v1084 = vpop.f32.mrb[0].mxu0
        %1085 = vdwg.mxu0
        %v1086 = vadd.f32 %v844, %v1083
        %1087 = vrot.lane.b32.xlu0 %v366, 80
        %v1088 = vpop.permute.xlu0 %1087
        %1089 = vrot.lane.b32.xlu0 %v366, 16
        %v1090 = vpop.permute.xlu0 %1089
        %v1091 = vsel %vm373, %v1088, 0
        %v1093 = vsel %vm373, %v1090, 0
        %1095 = vmatprep.subr.mxu0 0.0
        %1096 = vmatpush1.xpose.msra.mxu0 %v1093
        %1097 = vmatprep.subr.mxu0 0.0
        %1098 = vmatpush1.xpose.msra.mxu0 0.0
        %1099 = vmatprep.subr.mxu0 0.0
        %1100 = vmatpush1.xpose.msra.mxu0 0.0
        %1101 = vmatprep.subr.mxu0 0.0
        %1102 = vmatpush1.xpose.msra.mxu0 0.0
        %1103 = vmatprep.subr.mxu0 0.0
        %1104 = vmatpush1.xpose.msra.mxu0 0.0
        %1105 = vmatprep.subr.mxu0 0.0
        %1106 = vmatpush1.xpose.msra.mxu0 0.0
        %1107 = vmatprep.subr.mxu0 0.0
        %1108 = vmatpush1.xpose.msra.mxu0 0.0
        %1109 = vmatprep.subr.mxu0 0.0
        %1110 = vmatpush1.xpose.msra.mxu0 0.0
        %1111 = vmatprep.subr.mxu0 0.0
        %1112 = vmatpush1.xpose.msra.mxu0 0.0
        %1113 = vmatprep.subr.mxu0 0.0
        %1114 = vmatpush1.xpose.msra.mxu0 0.0
        %1115 = vmatprep.subr.mxu0 0.0
        %1116 = vmatpush1.xpose.msra.mxu0 0.0
        %1117 = vmatprep.subr.mxu0 0.0
        %1118 = vmatpush1.xpose.msra.mxu0 0.0
        %1119 = vmatprep.subr.mxu0 0.0
        %1120 = vmatpush1.xpose.msra.mxu0 0.0
        %1121 = vmatprep.subr.mxu0 0.0
        %1122 = vmatpush1.xpose.msra.mxu0 0.0
        %1123 = vmatprep.subr.mxu0 0.0
        %1124 = vmatpush1.xpose.msra.mxu0 0.0
        %1125 = vmatprep.subr.mxu0 0.0
        %1126 = vmatpush1.xpose.msra.mxu0 0.0
        %1127 = vmatprep.subr.mxu0 0.0
        %1128 = vmatpush1.xpose.msra.mxu0 0.0
        %1129 = vmatprep.subr.mxu0 0.0
        %1130 = vmatpush1.xpose.msra.mxu0 0.0
        %1131 = vmatprep.subr.mxu0 0.0
        %1132 = vmatpush1.xpose.msra.mxu0 0.0
        %1133 = vmatprep.subr.mxu0 0.0
        %1134 = vmatpush1.xpose.msra.mxu0 0.0
        %1135 = vmatprep.subr.mxu0 0.0
        %1136 = vmatpush1.xpose.msra.mxu0 0.0
        %1137 = vmatprep.subr.mxu0 0.0
        %1138 = vmatpush1.xpose.msra.mxu0 0.0
        %1139 = vmatprep.subr.mxu0 0.0
        %1140 = vmatpush1.xpose.msra.mxu0 0.0
        %1141 = vmatprep.subr.mxu0 0.0
        %1142 = vmatpush1.xpose.msra.mxu0 0.0
        %1143 = vmatprep.subr.mxu0 0.0
        %1144 = vmatpush1.xpose.msra.mxu0 0.0
        %1145 = vmatprep.subr.mxu0 0.0
        %1146 = vmatpush1.xpose.msra.mxu0 0.0
        %1147 = vmatprep.subr.mxu0 0.0
        %1148 = vmatpush1.xpose.msra.mxu0 0.0
        %1149 = vmatprep.subr.mxu0 0.0
        %1150 = vmatpush1.xpose.msra.mxu0 0.0
        %1151 = vmatprep.subr.mxu0 0.0
        %1152 = vmatpush1.xpose.msra.mxu0 0.0
        %1153 = vmatprep.subr.mxu0 0.0
        %1154 = vmatpush1.xpose.msra.mxu0 0.0
        %1155 = vmatprep.subr.mxu0 0.0
        %1156 = vmatpush1.xpose.msra.mxu0 0.0
        %1157 = vmatprep.subr.mxu0 0.0
        %1158 = vmatpush1.xpose.msra.mxu0 0.0
        %1159 = vmatprep.mubr.f32.mxu0 0.0
        %1160 = vmatmul.mubr.f32.gmra.mrb[0].mxu0 %v1091
        %v1161 = vpop.f32.mrb[0].mxu0
        %v1162 = vadd.f32 0.0, %v1161
        %v1163 = vpop.f32.mrb[0].mxu0
        %1164 = vdwg.mxu0
        %v1165 = vmul.f32 %v1162, 0.25
        %v1166 = vsel %vm449, %v1165, -inf
        %1167 = vmax.xlane.f32.xlu0 %v1166
        %v1168 = vpop.xlane.xlu0 %1167
        %v1169 = vsub.f32 %v1165, %v1168
        %v1170 = vmul.f32 %v1169, 1.442695
        %v1171 = vpow.pop %v1170
        %v1172 = vsel %vm449, %v1171, 0.0
        %1173 = vadd.xlane.f32.xlu0 %v1172
        %v1174 = vpop.xlane.xlu0 %1173
        %v1175 = vrcp.pop %v1174
        %v1176 = vmul.f32 %v1171, %v1175
        %1177 = vrot.lane.b32.xlu0 %v368, 80
        %v1178 = vpop.permute.xlu0 %1177
        %v1181 = vsel %vm449, %v1176, 0
        %1183 = vmatprep.subr.mxu0 0.0
        %1184 = vmatpush1.msra.mxu0 %v1178
        %1185 = vmatprep.subr.mxu0 0.0
        %1186 = vmatpush1.msra.mxu0 0.0
        %1187 = vmatprep.subr.mxu0 0.0
        %1188 = vmatpush1.msra.mxu0 0.0
        %1189 = vmatprep.subr.mxu0 0.0
        %1190 = vmatpush1.msra.mxu0 0.0
        %1191 = vmatprep.subr.mxu0 0.0
        %1192 = vmatpush1.msra.mxu0 0.0
        %1193 = vmatprep.subr.mxu0 0.0
        %1194 = vmatpush1.msra.mxu0 0.0
        %1195 = vmatprep.subr.mxu0 0.0
        %1196 = vmatpush1.msra.mxu0 0.0
        %1197 = vmatprep.subr.mxu0 0.0
        %1198 = vmatpush1.msra.mxu0 0.0
        %1199 = vmatprep.subr.mxu0 0.0
        %1200 = vmatpush1.msra.mxu0 0.0
        %1201 = vmatprep.subr.mxu0 0.0
        %1202 = vmatpush1.msra.mxu0 0.0
        %1203 = vmatprep.subr.mxu0 0.0
        %1204 = vmatpush1.msra.mxu0 0.0
        %1205 = vmatprep.subr.mxu0 0.0
        %1206 = vmatpush1.msra.mxu0 0.0
        %1207 = vmatprep.subr.mxu0 0.0
        %1208 = vmatpush1.msra.mxu0 0.0
        %1209 = vmatprep.subr.mxu0 0.0
        %1210 = vmatpush1.msra.mxu0 0.0
        %1211 = vmatprep.subr.mxu0 0.0
        %1212 = vmatpush1.msra.mxu0 0.0
        %1213 = vmatprep.subr.mxu0 0.0
        %1214 = vmatpush1.msra.mxu0 0.0
        %1215 = vmatprep.subr.mxu0 0.0
        %1216 = vmatpush1.msra.mxu0 0.0
        %1217 = vmatprep.subr.mxu0 0.0
        %1218 = vmatpush1.msra.mxu0 0.0
        %1219 = vmatprep.subr.mxu0 0.0
        %1220 = vmatpush1.msra.mxu0 0.0
        %1221 = vmatprep.subr.mxu0 0.0
        %1222 = vmatpush1.msra.mxu0 0.0
        %1223 = vmatprep.subr.mxu0 0.0
        %1224 = vmatpush1.msra.mxu0 0.0
        %1225 = vmatprep.subr.mxu0 0.0
        %1226 = vmatpush1.msra.mxu0 0.0
        %1227 = vmatprep.subr.mxu0 0.0
        %1228 = vmatpush1.msra.mxu0 0.0
        %1229 = vmatprep.subr.mxu0 0.0
        %1230 = vmatpush1.msra.mxu0 0.0
        %1231 = vmatprep.subr.mxu0 0.0
        %1232 = vmatpush1.msra.mxu0 0.0
        %1233 = vmatprep.subr.mxu0 0.0
        %1234 = vmatpush1.msra.mxu0 0.0
        %1235 = vmatprep.subr.mxu0 0.0
        %1236 = vmatpush1.msra.mxu0 0.0
        %1237 = vmatprep.subr.mxu0 0.0
        %1238 = vmatpush1.msra.mxu0 0.0
        %1239 = vmatprep.subr.mxu0 0.0
        %1240 = vmatpush1.msra.mxu0 0.0
        %1241 = vmatprep.subr.mxu0 0.0
        %1242 = vmatpush1.msra.mxu0 0.0
        %1243 = vmatprep.subr.mxu0 0.0
        %1244 = vmatpush1.msra.mxu0 0.0
        %1245 = vmatprep.subr.mxu0 0.0
        %1246 = vmatpush1.msra.mxu0 0.0
        %1247 = vmatprep.mubr.f32.mxu0 0.0
        %1248 = vmatmul.mubr.f32.gmra.mrb[0].mxu0 %v1181
        %v1249 = vpop.f32.mrb[0].mxu0
        %v1250 = vadd.f32 0.0, %v1249
        %v1251 = vpop.f32.mrb[0].mxu0
        %1252 = vdwg.mxu0
        %v1254 = vsel %vm373, %v1250, 0
        %1256 = vmatprep.subr.mxu0 0.0
        %1257 = vmatpush1.msra.mxu0 %v263
        %1258 = vmatprep.subr.mxu0 0.0
        %1259 = vmatpush1.msra.mxu0 %v264
        %1260 = vmatprep.subr.mxu0 0.0
        %1261 = vmatpush1.msra.mxu0 0.0
        %1262 = vmatprep.subr.mxu0 0.0
        %1263 = vmatpush1.msra.mxu0 0.0
        %1264 = vmatprep.subr.mxu0 0.0
        %1265 = vmatpush1.msra.mxu0 0.0
        %1266 = vmatprep.subr.mxu0 0.0
        %1267 = vmatpush1.msra.mxu0 0.0
        %1268 = vmatprep.subr.mxu0 0.0
        %1269 = vmatpush1.msra.mxu0 0.0
        %1270 = vmatprep.subr.mxu0 0.0
        %1271 = vmatpush1.msra.mxu0 0.0
        %1272 = vmatprep.subr.mxu0 0.0
        %1273 = vmatpush1.msra.mxu0 0.0
        %1274 = vmatprep.subr.mxu0 0.0
        %1275 = vmatpush1.msra.mxu0 0.0
        %1276 = vmatprep.subr.mxu0 0.0
        %1277 = vmatpush1.msra.mxu0 0.0
        %1278 = vmatprep.subr.mxu0 0.0
        %1279 = vmatpush1.msra.mxu0 0.0
        %1280 = vmatprep.subr.mxu0 0.0
        %1281 = vmatpush1.msra.mxu0 0.0
        %1282 = vmatprep.subr.mxu0 0.0
        %1283 = vmatpush1.msra.mxu0 0.0
        %1284 = vmatprep.subr.mxu0 0.0
        %1285 = vmatpush1.msra.mxu0 0.0
        %1286 = vmatprep.subr.mxu0 0.0
        %1287 = vmatpush1.msra.mxu0 0.0
        %1288 = vmatprep.subr.mxu0 0.0
        %1289 = vmatpush1.msra.mxu0 0.0
        %1290 = vmatprep.subr.mxu0 0.0
        %1291 = vmatpush1.msra.mxu0 0.0
        %1292 = vmatprep.subr.mxu0 0.0
        %1293 = vmatpush1.msra.mxu0 0.0
        %1294 = vmatprep.subr.mxu0 0.0
        %1295 = vmatpush1.msra.mxu0 0.0
        %1296 = vmatprep.subr.mxu0 0.0
        %1297 = vmatpush1.msra.mxu0 0.0
        %1298 = vmatprep.subr.mxu0 0.0
        %1299 = vmatpush1.msra.mxu0 0.0
        %1300 = vmatprep.subr.mxu0 0.0
        %1301 = vmatpush1.msra.mxu0 0.0
        %1302 = vmatprep.subr.mxu0 0.0
        %1303 = vmatpush1.msra.mxu0 0.0
        %1304 = vmatprep.subr.mxu0 0.0
        %1305 = vmatpush1.msra.mxu0 0.0
        %1306 = vmatprep.subr.mxu0 0.0
        %1307 = vmatpush1.msra.mxu0 0.0
        %1308 = vmatprep.subr.mxu0 0.0
        %1309 = vmatpush1.msra.mxu0 0.0
        %1310 = vmatprep.subr.mxu0 0.0
        %1311 = vmatpush1.msra.mxu0 0.0
        %1312 = vmatprep.subr.mxu0 0.0
        %1313 = vmatpush1.msra.mxu0 0.0
        %1314 = vmatprep.subr.mxu0 0.0
        %1315 = vmatpush1.msra.mxu0 0.0
        %1316 = vmatprep.subr.mxu0 0.0
        %1317 = vmatpush1.msra.mxu0 0.0
        %1318 = vmatprep.subr.mxu0 0.0
        %1319 = vmatpush1.msra.mxu0 0.0
        %1320 = vmatprep.mubr.f32.mxu0 0.0
        %1321 = vmatmul.mubr.f32.gmra.mrb[0].mxu0 %v1254
        %v1322 = vpop.f32.mrb[0].mxu0
        %v1323 = vadd.f32 0.0, %v1322
        %v1324 = vpop.f32.mrb[0].mxu0
        %1325 = vdwg.mxu0
        %v1326 = vadd.f32 %v1086, %v1323
        %v1328 = vlaneseq
        %v1329 = vshrl.u32 %v1328, 7
        %v1330 = vsub.s32 0, %v1329
        %v1331 = vrot.slane %v265, %v1330
        %v1333 = vadd.f32 %v1326, %v1331
        %1334 = vst.msk [vmem:[%s242] sm:$0xff] %vm267, %v1333
        %s1335 = sand.u32 %s159, 1
        %s1336 = scalar_lea.sflag [#allocation3], %s1335
        %s1337 = sand.u32 %s159, 1
        %s1338 = smul.addr %s1337, 8
        %s1339 = scalar_lea.vmem [#allocation2], %s1338
        // Predicated region
        $region45: #{tpu_custom_call.1} parent=43 // pred_check
          %p1340 = pneg %p169
        $region46: #{tpu_custom_call.1} parent=43 // pred_check_branch
          %1342 = sbr.rel (%p1340) target = $region48
        $region47: #{tpu_custom_call.1} parent=43 // pred_region
          %s1344 = ssub.s32 128, 128
          %1345 = vsyncadd %s1336, %s1344
          %s1346 = smul.addr %s20, 128
          %s1347 = scalar_lea.hbm %s6, %s1346
          %s1349 = sshll.u32 %s1339, 4
          %s1350 = int_to_ptr.vmem [resolvable:$true] %s1349
          %1352 = dma.vmem_to_hbm [thread:$0]  %s1350, 128, %s1347, %s1336
        $region48: #{tpu_custom_call.1} parent=43 // pred_fallthru
          _
      $region44: #{tpu_custom_call.1} parent=5 // pred_fallthru
        _
      %p1353 = scmp.le.s32.totalorder 2, %s15
      // Predicated region
      $region49: #{tpu_custom_call.1} parent=5 // pred_check
        %p1354 = pneg %p1353
      $region50: #{tpu_custom_call.1} parent=5 // pred_check_branch
        %1356 = sbr.rel (%p1354) target = $region52
      $region51: #{tpu_custom_call.1} parent=5 // pred_region
        %s1357 = ssub.s32 %s15, 2
        // Predicated region
        $region53: #{tpu_custom_call.1} parent=51 // pred_check
          %p1358 = pneg %p175
        $region54: #{tpu_custom_call.1} parent=51 // pred_check_branch
          %1360 = sbr.rel (%p1358) target = $region56
        $region55: #{tpu_custom_call.1} parent=51 // pred_region
          %s1361 = sand.u32 %s160, 1
          %s1362 = scalar_lea.sflag [#allocation3], %s1361
          %s1363 = sand.u32 %s160, 1
          %s1364 = smul.addr %s1363, 8
          %s1365 = scalar_lea.vmem [#allocation2], %s1364
          %1366 = dma.done %s1362, 128
        $region56: #{tpu_custom_call.1} parent=51 // pred_fallthru
          _
      $region52: #{tpu_custom_call.1} parent=5 // pred_fallthru
        _
    $region6: #{tpu_custom_call.1} parent=1 // loop_footer
      %s19 = sadd.s32 1, %s15
    $region7: #{tpu_custom_call.1} parent=1 // loop_footer_branch
      %14 = sbr.rel target = $region3
    $region8: #{tpu_custom_call.1} parent=1 // loop_exit
      _
    %1367 = vsyncpa [#allocation3], 1
    %s1368 = scalar_lea.sflag [#allocation3], 1
    %1369 = vsyncpa %s1368, 1

</llo_original>
